<compile_context>
chip_gen: v7x
topology: tpu7x:2x2x1
jax: 0.10.0
libtpu: 0.0.40
codegen_flags: <defaults>
</compile_context>

<pallas_src>
import jax
import jax.numpy as jnp
from jax import lax
from jax.experimental import pallas as pl
from jax.experimental.pallas import tpu as pltpu

BN_EPS = 1e-5


def _make_kernel(nb, cin, ct, h0, w0):
    """Builds the kernel closure for static (batch, cin, cout_tile, H0, W0)."""
    wp = w0 + 2                  # padded width (original resolution)
    lflat = h0 * wp              # flattened (row, padded-col) lane axis

    def kernel(x_ref, w_ref, gamma_ref, beta_ref, o_ref, xr_scr):
        # x_ref:     (1, Cin, (H0+2)*(W0+2))  zero-padded sample, rows flattened
        # w_ref:     (1, 3, 2*CT, 3*Cin)      row-parity collapsed weights [kx,(a,co),(dy,cin)]
        # gamma_ref: (CT, 1), beta_ref: (CT, 1)
        # o_ref:     (N, 2, 2, CT, H0*Wp)     resident phase-plane output block
        # xr_scr:    (3*Cin, H0*Wp)           row-tap staging scratch
        n = pl.program_id(1)

        # ---- stage 0: row-tap staging (3 shifted lane-slices, not an H0 loop) ------
        for dy in range(3):
            xr_scr[dy * cin:(dy + 1) * cin, :] = (
                x_ref[0, :, dy * wp: dy * wp + lflat])
        xr = xr_scr[...]                                     # (3Cin, H0*Wp)

        # ---- stage 1: three large 2-D MXU matmuls (one per kx) ---------------------
        # g[kx][a*CT+co, i*Wp + pc] = sum_{dy,cin} w1[kx,(a,co),(dy,cin)] * xpad[cin,i+dy,pc]
        g = [jnp.dot(w_ref[0, kx], xr, preferred_element_type=jnp.float32)
             for kx in range(3)]                             # each (2CT, H0*Wp) f32

        # ---- stage 2: column taps / x2 column upsample as lane shifts --------------
        # output col q = 2j+b reads padded col j + (b+kx+1)//2  -> shift left by 0/1/2
        def shl(v, d):                                       # shl(v,d)[:, l] = v[:, l+d]
            if d == 0:
                return v
            tail = jnp.zeros((v.shape[0], d), v.dtype)
            return jnp.concatenate([v[:, d:], tail], axis=1)

        s_g1 = shl(g[1], 1)
        p0 = g[0] + s_g1 + shl(g[2], 1)                      # column parity b = 0
        p1 = shl(g[0], 1) + s_g1 + shl(g[2], 2)              # column parity b = 1

        # ---- dense bulk stores of this sample's four phase planes ------------------
        o_ref[n, 0, 0, :, :] = p0[:ct]                       # (a=0, b=0)
        o_ref[n, 1, 0, :, :] = p0[ct:]                       # (a=1, b=0)
        o_ref[n, 0, 1, :, :] = p1[:ct]                       # (a=0, b=1)
        o_ref[n, 1, 1, :, :] = p1[ct:]                       # (a=1, b=1)

        # ---- finalize: two-pass batch-norm stats + normalize + ReLU (vectorized) ---
        @pl.when(n == pl.num_programs(1) - 1)
        def _finalize():
            count = float(nb * 4 * h0 * w0)                  # N * 2H0 * 2W0 per channel
            col = lax.broadcasted_iota(jnp.int32, (1, 1, 1, 1, lflat), 4) % wp
            maskf = (col < w0).astype(jnp.float32)           # drop 2 pad cols per row
            blk = o_ref[...]                                 # (N, 2, 2, CT, H0*Wp) f32

            s = jnp.sum(blk * maskf, axis=4, keepdims=True)
            s = jnp.sum(s, axis=(0, 1, 2), keepdims=True)    # (1,1,1,CT,1)
            mean = s * (1.0 / count)

            d = (blk - mean) * maskf
            v = jnp.sum(d * d, axis=4, keepdims=True)
            v = jnp.sum(v, axis=(0, 1, 2), keepdims=True)
            var = v * (1.0 / count)                          # biased variance

            gam = gamma_ref[...].reshape(1, 1, 1, ct, 1)
            bet = beta_ref[...].reshape(1, 1, 1, ct, 1)
            scale = gam * lax.rsqrt(var + BN_EPS)
            shift = bet - mean * scale
            o_ref[...] = jnp.maximum(blk * scale + shift, 0.0)

    return kernel


def upconv_block(x_nchw, w_oihw, gamma, beta, *, cout_tile=None,
                 compute_dtype=jnp.float32):
    """Pallas implementation of UpConvBlock.forward.  x_nchw: (N, Cin, H0, W0)."""
    nb, cin, h0, w0 = x_nchw.shape
    cout = w_oihw.shape[0]
    if cout_tile is None:
        # >=2 tiles lets the "parallel" axis shard across v7x's two TensorCores, but
        # keep tiles a multiple of 8 sublanes so all BlockSpecs stay layout-aligned.
        cout_tile = cout // 2 if (cout % 16 == 0) else cout
    assert cout % cout_tile == 0
    assert cout_tile == cout or cout_tile % 8 == 0
    n_ct = cout // cout_tile

    hp, wp = h0 + 2, w0 + 2
    l_in = hp * wp
    lflat = h0 * wp

    # Zero-pad at ORIGINAL resolution and flatten (H, W): lane-dense input last axis.
    xp = jnp.pad(x_nchw, ((0, 0), (0, 0), (1, 1), (1, 1)))
    xp = xp.reshape(nb, cin, l_in).astype(compute_dtype)

    # Host-side row-parity-collapsed weights:
    #   w1[kx, a, co, dy*Cin+cin] = sum_{ky: (a+ky+1)//2 == dy} w[co, cin, ky, kx]
    my = jnp.array([[[1, 0, 0], [0, 1, 0], [0, 1, 0]],       # a = 0 : ky -> dy {0,1,1}
                    [[0, 1, 0], [0, 1, 0], [0, 0, 1]]],      # a = 1 : ky -> dy {1,1,2}
                   dtype=jnp.float32)
    w1 = jnp.einsum('akd,oiky->yaodi', my, w_oihw.astype(jnp.float32))
    # pre-tile over cout so the channel-tile BlockSpec slices a leading dim
    w1 = w1.reshape(3, 2, n_ct, cout_tile, 3 * cin)
    w1 = jnp.transpose(w1, (2, 0, 1, 3, 4)).reshape(n_ct, 3, 2 * cout_tile, 3 * cin)
    w1 = w1.astype(compute_dtype)

    gamma2 = gamma.reshape(cout, 1).astype(jnp.float32)
    beta2 = beta.reshape(cout, 1).astype(jnp.float32)

    kernel = _make_kernel(nb, cin, cout_tile, h0, w0)

    esize = jnp.dtype(compute_dtype).itemsize
    vmem_est = (nb * 4 * cout_tile * lflat * 4               # resident output block
                + 2 * cin * l_in * esize                     # double-buffered input
                + 2 * 3 * 2 * cout_tile * 3 * cin * esize    # double-buffered weights
                + 3 * cin * lflat * esize)                   # staging scratch
    vmem_limit = int(min(max(4 * vmem_est, 32 * 1024 * 1024), 60 * 1024 * 1024))

    out5 = pl.pallas_call(
        kernel,
        out_shape=jax.ShapeDtypeStruct((nb, 2, 2, cout, lflat), jnp.float32),
        grid_spec=pltpu.PrefetchScalarGridSpec(
            num_scalar_prefetch=0,
            grid=(n_ct, nb),                                 # (channel tiles, samples)
            in_specs=[
                pl.BlockSpec((1, cin, l_in), lambda t, i: (i, 0, 0)),
                pl.BlockSpec((1, 3, 2 * cout_tile, 3 * cin),
                             lambda t, i: (t, 0, 0, 0)),
                pl.BlockSpec((cout_tile, 1), lambda t, i: (t, 0)),
                pl.BlockSpec((cout_tile, 1), lambda t, i: (t, 0)),
            ],
            out_specs=pl.BlockSpec((nb, 2, 2, cout_tile, lflat),
                                   lambda t, i: (0, 0, 0, t, 0)),
            scratch_shapes=[pltpu.VMEM((3 * cin, lflat), compute_dtype)],
        ),
        compiler_params=pltpu.CompilerParams(
            dimension_semantics=("parallel", "arbitrary"),
            vmem_limit_bytes=vmem_limit),
    )(xp, w1, gamma2, beta2)

    # Reassemble the four phase planes into NCHW (small XLA transpose, see TODO above).
    out = out5.reshape(nb, 2, 2, cout, h0, wp)[..., :w0]     # drop the 2 pad columns
    out = jnp.transpose(out, (0, 3, 4, 1, 5, 2))             # (N, C, H0, a, W0, b)
    return out.reshape(nb, cout, 2 * h0, 2 * w0)


def reference_upconv_block(x_nchw, w_oihw, gamma, beta):
    """Pure-JAX reference matching PyTorch semantics (NCHW, training-mode BN)."""
    x = jnp.repeat(jnp.repeat(x_nchw, 2, axis=2), 2, axis=3)          # nearest x2
    y = lax.conv_general_dilated(
        x, w_oihw, window_strides=(1, 1), padding="SAME",
        dimension_numbers=("NCHW", "OIHW", "NCHW"))
    mean = jnp.mean(y, axis=(0, 2, 3), keepdims=True)
    var = jnp.mean((y - mean) ** 2, axis=(0, 2, 3), keepdims=True)
    y = (y - mean) * lax.rsqrt(var + BN_EPS)
    y = y * gamma.reshape(1, -1, 1, 1) + beta.reshape(1, -1, 1, 1)
    return jnp.maximum(y, 0.0)


if __name__ == "__main__":
    # Small shapes consistent with the module: N=2, ch_in=4, ch_out=8, 16x16 spatial.
    N, CH_IN, CH_OUT, HW = 2, 4, 8, 16

    key = jax.random.PRNGKey(0)
    k_x, k_w, k_g, k_b = jax.random.split(key, 4)
    x = jax.random.normal(k_x, (N, CH_IN, HW, HW), dtype=jnp.float32)
    w = (jax.random.normal(k_w, (CH_OUT, CH_IN, 3, 3), dtype=jnp.float32)
         * (1.0 / jnp.sqrt(CH_IN * 9.0)))
    gamma = 1.0 + 0.1 * jax.random.normal(k_g, (CH_OUT,), dtype=jnp.float32)
    beta = 0.1 * jax.random.normal(k_b, (CH_OUT,), dtype=jnp.float32)

    out = jax.jit(upconv_block)(x, w, gamma, beta)
    out = jax.block_until_ready(out)

    ref = reference_upconv_block(x, w, gamma, beta)
    assert out.shape == (N, CH_OUT, 2 * HW, 2 * HW), out.shape
    err = float(jnp.max(jnp.abs(out - ref)))
    assert jnp.allclose(out, ref, atol=1e-3, rtol=1e-3), err

    print("KERNEL_OK")
</pallas_src>

<mosaic_0001>
module attributes {stable_mosaic.version = 11 : i64} {
  func.func @kernel(%arg0: i32, %arg1: i32, %arg2: memref<1x4x324xf32, #tpu.memory_space<vmem>>, %arg3: memref<1x3x16x12xf32, #tpu.memory_space<vmem>>, %arg4: memref<8x1xf32, #tpu.memory_space<vmem>>, %arg5: memref<8x1xf32, #tpu.memory_space<vmem>>, %arg6: memref<2x2x2x8x288xf32, #tpu.memory_space<vmem>>, %arg7: memref<12x288xf32, #tpu.memory_space<vmem>>) attributes {dimension_semantics = [#tpu.dimension_semantics<parallel>, #tpu.dimension_semantics<arbitrary>], iteration_bounds = array<i64: 1, 2>, scalar_prefetch = 0 : i64, scratch_operands = 1 : i64, tpu.core_type = #tpu.core_type<tc>, window_params = [{transform_indices = @transform_0, window_bounds = array<i64: 1, 4, 324>}, {transform_indices = @transform_1, window_bounds = array<i64: 1, 3, 16, 12>}, {transform_indices = @transform_2, window_bounds = array<i64: 8, 1>}, {transform_indices = @transform_3, window_bounds = array<i64: 8, 1>}, {transform_indices = @transform_4, window_bounds = array<i64: 2, 2, 2, 8, 288>}]} {
    %c0 = arith.constant 0 : index
    %c0_0 = arith.constant 0 : index
    %c0_1 = arith.constant 0 : index
    %0 = vector.load %arg2[%c0, %c0_0, %c0_1] : memref<1x4x324xf32, #tpu.memory_space<vmem>>, vector<1x4x288xf32>
    %1 = vector.shape_cast %0 : vector<1x4x288xf32> to vector<4x288xf32>
    %c0_2 = arith.constant 0 : index
    %c0_3 = arith.constant 0 : index
    %2 = vector.load %arg7[%c0_2, %c0_3] : memref<12x288xf32, #tpu.memory_space<vmem>>, vector<4x288xf32>
    tpu.vector_store %arg7[%c0_2, %c0_3], %1 {strides = array<i32>} : memref<12x288xf32, #tpu.memory_space<vmem>>, vector<4x288xf32>,
    %c0_4 = arith.constant 0 : index
    %c0_5 = arith.constant 0 : index
    %c18 = arith.constant 18 : index
    %3 = vector.load %arg2[%c0_4, %c0_5, %c18] : memref<1x4x324xf32, #tpu.memory_space<vmem>>, vector<1x4x288xf32>
    %4 = vector.shape_cast %3 : vector<1x4x288xf32> to vector<4x288xf32>
    %c4 = arith.constant 4 : index
    %c0_6 = arith.constant 0 : index
    %5 = vector.load %arg7[%c4, %c0_6] : memref<12x288xf32, #tpu.memory_space<vmem>>, vector<4x288xf32>
    tpu.vector_store %arg7[%c4, %c0_6], %4 {strides = array<i32>} : memref<12x288xf32, #tpu.memory_space<vmem>>, vector<4x288xf32>,
    %c0_7 = arith.constant 0 : index
    %c0_8 = arith.constant 0 : index
    %c36 = arith.constant 36 : index
    %6 = vector.load %arg2[%c0_7, %c0_8, %c36] : memref<1x4x324xf32, #tpu.memory_space<vmem>>, vector<1x4x288xf32>
    %7 = vector.shape_cast %6 : vector<1x4x288xf32> to vector<4x288xf32>
    %c8 = arith.constant 8 : index
    %c0_9 = arith.constant 0 : index
    %8 = vector.load %arg7[%c8, %c0_9] : memref<12x288xf32, #tpu.memory_space<vmem>>, vector<4x288xf32>
    tpu.vector_store %arg7[%c8, %c0_9], %7 {strides = array<i32>} : memref<12x288xf32, #tpu.memory_space<vmem>>, vector<4x288xf32>,
    %c0_10 = arith.constant 0 : index
    %c0_11 = arith.constant 0 : index
    %9 = vector.load %arg7[%c0_10, %c0_11] : memref<12x288xf32, #tpu.memory_space<vmem>>, vector<12x288xf32>
    %c0_12 = arith.constant 0 : index
    %c0_13 = arith.constant 0 : index
    %c0_14 = arith.constant 0 : index
    %c0_15 = arith.constant 0 : index
    %10 = vector.load %arg3[%c0_12, %c0_13, %c0_14, %c0_15] : memref<1x3x16x12xf32, #tpu.memory_space<vmem>>, vector<1x1x16x12xf32>
    %11 = vector.shape_cast %10 : vector<1x1x16x12xf32> to vector<16x12xf32>
    %cst = arith.constant dense<0.000000e+00> : vector<16x288xf32>
    %12 = tpu.matmul %11, %9, %cst {dimension_numbers = #tpu.dot_dimension_numbers<[1], [0], [0], [1], [0, 0, 1, 1], [], []>} : vector<16x12xf32>, vector<12x288xf32>, vector<16x288xf32> -> vector<16x288xf32>
    %c0_16 = arith.constant 0 : index
    %c1 = arith.constant 1 : index
    %c0_17 = arith.constant 0 : index
    %c0_18 = arith.constant 0 : index
    %13 = vector.load %arg3[%c0_16, %c1, %c0_17, %c0_18] : memref<1x3x16x12xf32, #tpu.memory_space<vmem>>, vector<1x1x16x12xf32>
    %14 = vector.shape_cast %13 : vector<1x1x16x12xf32> to vector<16x12xf32>
    %cst_19 = arith.constant dense<0.000000e+00> : vector<16x288xf32>
    %15 = tpu.matmul %14, %9, %cst_19 {dimension_numbers = #tpu.dot_dimension_numbers<[1], [0], [0], [1], [0, 0, 1, 1], [], []>} : vector<16x12xf32>, vector<12x288xf32>, vector<16x288xf32> -> vector<16x288xf32>
    %c0_20 = arith.constant 0 : index
    %c2 = arith.constant 2 : index
    %c0_21 = arith.constant 0 : index
    %c0_22 = arith.constant 0 : index
    %16 = vector.load %arg3[%c0_20, %c2, %c0_21, %c0_22] : memref<1x3x16x12xf32, #tpu.memory_space<vmem>>, vector<1x1x16x12xf32>
    %17 = vector.shape_cast %16 : vector<1x1x16x12xf32> to vector<16x12xf32>
    %cst_23 = arith.constant dense<0.000000e+00> : vector<16x288xf32>
    %18 = tpu.matmul %17, %9, %cst_23 {dimension_numbers = #tpu.dot_dimension_numbers<[1], [0], [0], [1], [0, 0, 1, 1], [], []>} : vector<16x12xf32>, vector<12x288xf32>, vector<16x288xf32> -> vector<16x288xf32>
    %cst_24 = arith.constant 0.000000e+00 : f32
    %19 = vector.broadcast %cst_24 : f32 to vector<16x1xf32>
    %20 = vector.extract_strided_slice %15 {offsets = [0, 1], sizes = [16, 287], strides = [1, 1]} : vector<16x288xf32> to vector<16x287xf32>
    %21 = tpu.concatenate %20, %19 in 1 : vector<16x287xf32>, vector<16x1xf32> -> vector<16x288xf32>
    %22 = arith.addf %12, %21 : vector<16x288xf32>
    %cst_25 = arith.constant 0.000000e+00 : f32
    %23 = vector.broadcast %cst_25 : f32 to vector<16x1xf32>
    %24 = vector.extract_strided_slice %18 {offsets = [0, 1], sizes = [16, 287], strides = [1, 1]} : vector<16x288xf32> to vector<16x287xf32>
    %25 = tpu.concatenate %24, %23 in 1 : vector<16x287xf32>, vector<16x1xf32> -> vector<16x288xf32>
    %26 = arith.addf %22, %25 : vector<16x288xf32>
    %cst_26 = arith.constant 0.000000e+00 : f32
    %27 = vector.broadcast %cst_26 : f32 to vector<16x1xf32>
    %28 = vector.extract_strided_slice %12 {offsets = [0, 1], sizes = [16, 287], strides = [1, 1]} : vector<16x288xf32> to vector<16x287xf32>
    %29 = tpu.concatenate %28, %27 in 1 : vector<16x287xf32>, vector<16x1xf32> -> vector<16x288xf32>
    %30 = arith.addf %29, %21 : vector<16x288xf32>
    %cst_27 = arith.constant 0.000000e+00 : f32
    %31 = vector.broadcast %cst_27 : f32 to vector<16x2xf32>
    %32 = vector.extract_strided_slice %18 {offsets = [0, 2], sizes = [16, 286], strides = [1, 1]} : vector<16x288xf32> to vector<16x286xf32>
    %33 = tpu.concatenate %32, %31 in 1 : vector<16x286xf32>, vector<16x2xf32> -> vector<16x288xf32>
    %34 = arith.addf %30, %33 : vector<16x288xf32>
    %35 = vector.extract_strided_slice %26 {offsets = [0, 0], sizes = [8, 288], strides = [1, 1]} : vector<16x288xf32> to vector<8x288xf32>
    %36 = arith.index_cast %arg1 : i32 to index
    %c0_28 = arith.constant 0 : index
    %c0_29 = arith.constant 0 : index
    %c0_30 = arith.constant 0 : index
    %c0_31 = arith.constant 0 : index
    %37 = vector.load %arg6[%36, %c0_28, %c0_29, %c0_30, %c0_31] : memref<2x2x2x8x288xf32, #tpu.memory_space<vmem>>, vector<1x1x1x8x288xf32>
    %38 = vector.shape_cast %37 : vector<1x1x1x8x288xf32> to vector<8x288xf32>
    %39 = vector.shape_cast %35 : vector<8x288xf32> to vector<1x1x1x8x288xf32>
    tpu.vector_store %arg6[%36, %c0_28, %c0_29, %c0_30, %c0_31], %39 {strides = array<i32>} : memref<2x2x2x8x288xf32, #tpu.memory_space<vmem>>, vector<1x1x1x8x288xf32>,
    %40 = vector.extract_strided_slice %26 {offsets = [8, 0], sizes = [8, 288], strides = [1, 1]} : vector<16x288xf32> to vector<8x288xf32>
    %41 = arith.index_cast %arg1 : i32 to index
    %c1_32 = arith.constant 1 : index
    %c0_33 = arith.constant 0 : index
    %c0_34 = arith.constant 0 : index
    %c0_35 = arith.constant 0 : index
    %42 = vector.load %arg6[%41, %c1_32, %c0_33, %c0_34, %c0_35] : memref<2x2x2x8x288xf32, #tpu.memory_space<vmem>>, vector<1x1x1x8x288xf32>
    %43 = vector.shape_cast %42 : vector<1x1x1x8x288xf32> to vector<8x288xf32>
    %44 = vector.shape_cast %40 : vector<8x288xf32> to vector<1x1x1x8x288xf32>
    tpu.vector_store %arg6[%41, %c1_32, %c0_33, %c0_34, %c0_35], %44 {strides = array<i32>} : memref<2x2x2x8x288xf32, #tpu.memory_space<vmem>>, vector<1x1x1x8x288xf32>,
    %45 = vector.extract_strided_slice %34 {offsets = [0, 0], sizes = [8, 288], strides = [1, 1]} : vector<16x288xf32> to vector<8x288xf32>
    %46 = arith.index_cast %arg1 : i32 to index
    %c0_36 = arith.constant 0 : index
    %c1_37 = arith.constant 1 : index
    %c0_38 = arith.constant 0 : index
    %c0_39 = arith.constant 0 : index
    %47 = vector.load %arg6[%46, %c0_36, %c1_37, %c0_38, %c0_39] : memref<2x2x2x8x288xf32, #tpu.memory_space<vmem>>, vector<1x1x1x8x288xf32>
    %48 = vector.shape_cast %47 : vector<1x1x1x8x288xf32> to vector<8x288xf32>
    %49 = vector.shape_cast %45 : vector<8x288xf32> to vector<1x1x1x8x288xf32>
    tpu.vector_store %arg6[%46, %c0_36, %c1_37, %c0_38, %c0_39], %49 {strides = array<i32>} : memref<2x2x2x8x288xf32, #tpu.memory_space<vmem>>, vector<1x1x1x8x288xf32>,
    %50 = vector.extract_strided_slice %34 {offsets = [8, 0], sizes = [8, 288], strides = [1, 1]} : vector<16x288xf32> to vector<8x288xf32>
    %51 = arith.index_cast %arg1 : i32 to index
    %c1_40 = arith.constant 1 : index
    %c1_41 = arith.constant 1 : index
    %c0_42 = arith.constant 0 : index
    %c0_43 = arith.constant 0 : index
    %52 = vector.load %arg6[%51, %c1_40, %c1_41, %c0_42, %c0_43] : memref<2x2x2x8x288xf32, #tpu.memory_space<vmem>>, vector<1x1x1x8x288xf32>
    %53 = vector.shape_cast %52 : vector<1x1x1x8x288xf32> to vector<8x288xf32>
    %54 = vector.shape_cast %50 : vector<8x288xf32> to vector<1x1x1x8x288xf32>
    tpu.vector_store %arg6[%51, %c1_40, %c1_41, %c0_42, %c0_43], %54 {strides = array<i32>} : memref<2x2x2x8x288xf32, #tpu.memory_space<vmem>>, vector<1x1x1x8x288xf32>,
    %c1_i32 = arith.constant 1 : i32
    %55 = arith.cmpi eq, %arg1, %c1_i32 : i32
    %56 = arith.extui %55 : i1 to i32
    %c0_i32 = arith.constant 0 : i32
    %57 = arith.cmpi ne, %56, %c0_i32 : i32
    scf.if %57 {
      %58 = tpu.iota {dimensions = array<i32: 4>} : vector<1x1x1x1x288xi32>
      %c18_i32 = arith.constant 18 : i32
      %c0_i32_44 = arith.constant 0 : i32
      %59 = arith.cmpi eq, %c18_i32, %c0_i32_44 : i32
      %c1_i32_45 = arith.constant 1 : i32
      %60 = arith.select %59, %c1_i32_45, %c18_i32 : i32
      %61 = vector.broadcast %60 : i32 to vector<1x1x1x1x288xi32>
      %62 = arith.remsi %58, %61 : vector<1x1x1x1x288xi32>
      %c0_i32_46 = arith.constant 0 : i32
      %63 = vector.broadcast %c0_i32_46 : i32 to vector<1x1x1x1x288xi32>
      %64 = arith.cmpi ne, %62, %63 : vector<1x1x1x1x288xi32>
      %c0_i32_47 = arith.constant 0 : i32
      %65 = vector.broadcast %c0_i32_47 : i32 to vector<1x1x1x1x288xi32>
      %66 = arith.cmpi slt, %62, %65 : vector<1x1x1x1x288xi32>
      %c0_i32_48 = arith.constant 0 : i32
      %67 = arith.cmpi slt, %60, %c0_i32_48 : i32
      %68 = vector.broadcast %67 : i1 to vector<1x1x1x1x288xi1>
      %69 = vector.broadcast %68 : vector<1x1x1x1x288xi1> to vector<1x1x1x1x288xi1>
      %70 = arith.xori %66, %69 : vector<1x1x1x1x288xi1>
      %71 = arith.andi %70, %64 : vector<1x1x1x1x288xi1>
      %72 = vector.broadcast %60 : i32 to vector<1x1x1x1x288xi32>
      %73 = arith.addi %62, %72 : vector<1x1x1x1x288xi32>
      %74 = arith.select %71, %73, %62 : vector<1x1x1x1x288xi1>, vector<1x1x1x1x288xi32>
      %c16_i32 = arith.constant 16 : i32
      %75 = vector.broadcast %c16_i32 : i32 to vector<1x1x1x1x288xi32>
      %76 = arith.cmpi slt, %74, %75 : vector<1x1x1x1x288xi32>
      %77 = arith.extui %76 : vector<1x1x1x1x288xi1> to vector<1x1x1x1x288xi32>
      %78 = arith.sitofp %77 : vector<1x1x1x1x288xi32> to vector<1x1x1x1x288xf32>
      %c0_49 = arith.constant 0 : index
      %c0_50 = arith.constant 0 : index
      %c0_51 = arith.constant 0 : index
      %c0_52 = arith.constant 0 : index
      %c0_53 = arith.constant 0 : index
      %79 = vector.load %arg6[%c0_49, %c0_50, %c0_51, %c0_52, %c0_53] : memref<2x2x2x8x288xf32, #tpu.memory_space<vmem>>, vector<2x2x2x8x288xf32>
      %80 = vector.broadcast %78 : vector<1x1x1x1x288xf32> to vector<2x2x2x8x288xf32>
      %81 = arith.mulf %79, %80 : vector<2x2x2x8x288xf32>
      %cst_54 = arith.constant dense<0.000000e+00> : vector<2x2x2x8xf32>
      %82 = vector.multi_reduction <add>, %81, %cst_54 [4] : vector<2x2x2x8x288xf32> to vector<2x2x2x8xf32>
      %83 = vector.shape_cast %82 : vector<2x2x2x8xf32> to vector<2x2x2x8x1xf32>
      %cst_55 = arith.constant dense<0.000000e+00> : vector<8x1xf32>
      %84 = vector.multi_reduction <add>, %83, %cst_55 [0, 1, 2] : vector<2x2x2x8x1xf32> to vector<8x1xf32>
      %85 = vector.shape_cast %84 : vector<8x1xf32> to vector<1x1x1x8x1xf32>
      %cst_56 = arith.constant 4.8828125E-4 : f32
      %86 = vector.broadcast %cst_56 : f32 to vector<1x1x1x8x1xf32>
      %87 = arith.mulf %85, %86 : vector<1x1x1x8x1xf32>
      %88 = vector.broadcast %87 : vector<1x1x1x8x1xf32> to vector<2x2x2x8x288xf32>
      %89 = arith.subf %79, %88 : vector<2x2x2x8x288xf32>
      %90 = vector.broadcast %78 : vector<1x1x1x1x288xf32> to vector<2x2x2x8x288xf32>
      %91 = arith.mulf %89, %90 : vector<2x2x2x8x288xf32>
      %92 = arith.mulf %91, %91 : vector<2x2x2x8x288xf32>
      %cst_57 = arith.constant dense<0.000000e+00> : vector<2x2x2x8xf32>
      %93 = vector.multi_reduction <add>, %92, %cst_57 [4] : vector<2x2x2x8x288xf32> to vector<2x2x2x8xf32>
      %94 = vector.shape_cast %93 : vector<2x2x2x8xf32> to vector<2x2x2x8x1xf32>
      %cst_58 = arith.constant dense<0.000000e+00> : vector<8x1xf32>
      %95 = vector.multi_reduction <add>, %94, %cst_58 [0, 1, 2] : vector<2x2x2x8x1xf32> to vector<8x1xf32>
      %96 = vector.shape_cast %95 : vector<8x1xf32> to vector<1x1x1x8x1xf32>
      %cst_59 = arith.constant 4.8828125E-4 : f32
      %97 = vector.broadcast %cst_59 : f32 to vector<1x1x1x8x1xf32>
      %98 = arith.mulf %96, %97 : vector<1x1x1x8x1xf32>
      %c0_60 = arith.constant 0 : index
      %c0_61 = arith.constant 0 : index
      %99 = vector.load %arg4[%c0_60, %c0_61] : memref<8x1xf32, #tpu.memory_space<vmem>>, vector<8x1xf32>
      %100 = vector.shape_cast %99 : vector<8x1xf32> to vector<1x1x1x8x1xf32>
      %c0_62 = arith.constant 0 : index
      %c0_63 = arith.constant 0 : index
      %101 = vector.load %arg5[%c0_62, %c0_63] : memref<8x1xf32, #tpu.memory_space<vmem>>, vector<8x1xf32>
      %102 = vector.shape_cast %101 : vector<8x1xf32> to vector<1x1x1x8x1xf32>
      %cst_64 = arith.constant 9.99999974E-6 : f32
      %103 = vector.broadcast %cst_64 : f32 to vector<1x1x1x8x1xf32>
      %104 = arith.addf %98, %103 : vector<1x1x1x8x1xf32>
      %105 = math.rsqrt %104 : vector<1x1x1x8x1xf32>
      %106 = arith.mulf %100, %105 : vector<1x1x1x8x1xf32>
      %107 = arith.mulf %87, %106 : vector<1x1x1x8x1xf32>
      %108 = arith.subf %102, %107 : vector<1x1x1x8x1xf32>
      %109 = vector.broadcast %106 : vector<1x1x1x8x1xf32> to vector<2x2x2x8x288xf32>
      %110 = arith.mulf %79, %109 : vector<2x2x2x8x288xf32>
      %111 = vector.broadcast %108 : vector<1x1x1x8x1xf32> to vector<2x2x2x8x288xf32>
      %112 = arith.addf %110, %111 : vector<2x2x2x8x288xf32>
      %cst_65 = arith.constant 0.000000e+00 : f32
      %113 = vector.broadcast %cst_65 : f32 to vector<2x2x2x8x288xf32>
      %114 = arith.maximumf %112, %113 : vector<2x2x2x8x288xf32>
      %c0_66 = arith.constant 0 : index
      %c0_67 = arith.constant 0 : index
      %c0_68 = arith.constant 0 : index
      %c0_69 = arith.constant 0 : index
      %c0_70 = arith.constant 0 : index
      %115 = vector.load %arg6[%c0_66, %c0_67, %c0_68, %c0_69, %c0_70] : memref<2x2x2x8x288xf32, #tpu.memory_space<vmem>>, vector<2x2x2x8x288xf32>
      tpu.vector_store %arg6[%c0_66, %c0_67, %c0_68, %c0_69, %c0_70], %114 {strides = array<i32>} : memref<2x2x2x8x288xf32, #tpu.memory_space<vmem>>, vector<2x2x2x8x288xf32>,
    } else {
    }
    return
  }
  func.func @transform_0(%arg0: i32, %arg1: i32) -> (i32, i32, i32) {
    %c0_i32 = arith.constant 0 : i32
    %c0_i32_0 = arith.constant 0 : i32
    %c0_i32_1 = arith.constant 0 : i32
    return %arg1, %c0_i32, %c0_i32_0 : i32, i32, i32
  }
  func.func @transform_1(%arg0: i32, %arg1: i32) -> (i32, i32, i32, i32) {
    %c0_i32 = arith.constant 0 : i32
    %c0_i32_0 = arith.constant 0 : i32
    %c0_i32_1 = arith.constant 0 : i32
    %c0_i32_2 = arith.constant 0 : i32
    return %arg0, %c0_i32, %c0_i32_0, %c0_i32_1 : i32, i32, i32, i32
  }
  func.func @transform_2(%arg0: i32, %arg1: i32) -> (i32, i32) {
    %c0_i32 = arith.constant 0 : i32
    %c0_i32_0 = arith.constant 0 : i32
    return %arg0, %c0_i32 : i32, i32
  }
  func.func @transform_3(%arg0: i32, %arg1: i32) -> (i32, i32) {
    %c0_i32 = arith.constant 0 : i32
    %c0_i32_0 = arith.constant 0 : i32
    return %arg0, %c0_i32 : i32, i32
  }
  func.func @transform_4(%arg0: i32, %arg1: i32) -> (i32, i32, i32, i32, i32) {
    %c0_i32 = arith.constant 0 : i32
    %c0_i32_0 = arith.constant 0 : i32
    %c0_i32_1 = arith.constant 0 : i32
    %c0_i32_2 = arith.constant 0 : i32
    %c0_i32_3 = arith.constant 0 : i32
    return %c0_i32, %c0_i32_0, %c0_i32_1, %arg0, %c0_i32_2 : i32, i32, i32, i32, i32
  }
}

</mosaic_0001>

<llo_original>
// kernel: upconv_block.1
$region0: #{upconv_block.1}
  #allocation0 [shape = 'u32[]', space=smem, size = 0x4, offset = 0x4, fixed_abs, tag = 'smem constant byte address 0x4 - core index']
  #allocation1 [shape = 'u32[144,128]{1,0:T(1,128)}', space=vmem, size = 0x12000, scoped, tag = 'internal scratch']
  #allocation2 [shape = 'f32[12,288]{1,0:T(8,128)}', space=vmem, size = 0x6000, scoped, tag = 'scratch operand']
  %s0 = inlined_call_operand.vmem [shape: f32[2,4,324], index: 0, kind: input, shape index: {}]
  %s1 = inlined_call_operand.vmem [shape: f32[1,3,16,12], index: 1, kind: input, shape index: {}]
  %s2 = inlined_call_operand.vmem [shape: f32[8,1], index: 2, kind: input, shape index: {}]
  %s3 = inlined_call_operand.vmem [shape: f32[8,1], index: 3, kind: input, shape index: {}]
  %s4 = inlined_call_operand.vmem [shape: f32[2,2,2,8,288], index: 4, kind: output, shape index: {}]
  %s5 = sld [smem:[#allocation0]]
  $region53: #{upconv_block.1} parent=0
    _
  %s7 = ssub.s32 1, %s5
  %s8 = scalar_select 0, %s7, %s5
  loop: start=0, step=1, limit=4
  $region2: #{upconv_block.1} parent=0 // loop_pre_header
    _
  $region3: #{upconv_block.1} parent=0 // loop_header
    %s10 = sphi 0, %s14
    %p11 = scmp.ge.s32.totalorder %s10, 4
    %s17 = sphi 0, %s29
    %s18 = sphi 0, %s25
    %s19 = sphi 0, %s17
    %s20 = sphi 0, %s18
    %s21 = sphi 0, %s19
    %s22 = sphi 0, %s20
    %s32 = sphi 0, %s34
    %s35 = sphi 0, %s32
    %s36 = sphi 0, %s35
    %s52 = sphi 0, %s36
    %s58 = sphi 0, %s60
    %s61 = sphi 0, %s58
    %s62 = sphi 0, %s61
    %s78 = sphi 0, %s62
    %s84 = sphi 0, %s86
    %s87 = sphi 0, %s84
    %s88 = sphi 0, %s87
    %s104 = sphi 0, %s88
    %s110 = sphi 0, %s112
    %s113 = sphi 0, %s110
    %s114 = sphi 0, %s113
    %s130 = sphi 0, %s114
    %s136 = sphi 0, %s138
    %s139 = sphi 0, %s136
    %s140 = sphi 0, %s139
    %s156 = sphi 0, %s140
  $region4: #{upconv_block.1} parent=0 // loop_header_branch
    %13 = sbr.rel (%p11) target = $region8
  $region5: #{upconv_block.1} parent=0 // loop_body
    %s15 = ssub.s32 %s10, 1
    %s16 = ssub.s32 %s10, 2
    %s23 = sadd.s32 1, %s18
    %p24 = scmp.ge.s32.totalorder %s23, 2
    %s25 = scalar_select %p24, 0, %s23
    %s26 = sadd.s32 1, %s17
    %s27 = scalar_select %p24, %s26, %s17
    %p28 = scmp.ge.s32.totalorder %s27, 1
    %s29 = scalar_select %p28, 0, %s27
    %s30 = ssub.s32 %s18, %s25
    %p31 = scmp.eq.s32.totalorder %s30, 0
    %s33 = sadd.s32 %s32, 1
    %s34 = scalar_select %p31, %s32, %s33
    %p37 = pneg %p31
    %p38 = scmp.eq.s32.totalorder %s10, 1
    %p39 = por %p37, %p38
    %p40 = scmp.ne.s32.totalorder %s32, %s35
    %p41 = scmp.eq.s32.totalorder %s10, 0
    %p42 = por %p40, %p41
    %p43 = scmp.ne.s32.totalorder %s32, %s35
    %p44 = scmp.eq.s32.totalorder %s15, 1
    %p45 = por %p43, %p44
    %p46 = scmp.ne.s32.totalorder %s35, %s36
    %p47 = scmp.eq.s32.totalorder %s15, 0
    %p48 = por %p46, %p47
    %p49 = scmp.ne.s32.totalorder %s35, %s36
    %p50 = scmp.eq.s32.totalorder %s16, 1
    %p51 = por %p49, %p50
    %p53 = scmp.ne.s32.totalorder %s36, %s52
    %p54 = scmp.eq.s32.totalorder %s16, 0
    %p55 = por %p53, %p54
    %s56 = ssub.s32 %s17, %s29
    %p57 = scmp.eq.s32.totalorder %s56, 0
    %s59 = sadd.s32 %s58, 1
    %s60 = scalar_select %p57, %s58, %s59
    %p63 = pneg %p57
    %p64 = scmp.eq.s32.totalorder %s10, 1
    %p65 = por %p63, %p64
    %p66 = scmp.ne.s32.totalorder %s58, %s61
    %p67 = scmp.eq.s32.totalorder %s10, 0
    %p68 = por %p66, %p67
    %p69 = scmp.ne.s32.totalorder %s58, %s61
    %p70 = scmp.eq.s32.totalorder %s15, 1
    %p71 = por %p69, %p70
    %p72 = scmp.ne.s32.totalorder %s61, %s62
    %p73 = scmp.eq.s32.totalorder %s15, 0
    %p74 = por %p72, %p73
    %p75 = scmp.ne.s32.totalorder %s61, %s62
    %p76 = scmp.eq.s32.totalorder %s16, 1
    %p77 = por %p75, %p76
    %p79 = scmp.ne.s32.totalorder %s62, %s78
    %p80 = scmp.eq.s32.totalorder %s16, 0
    %p81 = por %p79, %p80
    %s82 = ssub.s32 %s17, %s29
    %p83 = scmp.eq.s32.totalorder %s82, 0
    %s85 = sadd.s32 %s84, 1
    %s86 = scalar_select %p83, %s84, %s85
    %p89 = pneg %p83
    %p90 = scmp.eq.s32.totalorder %s10, 1
    %p91 = por %p89, %p90
    %p92 = scmp.ne.s32.totalorder %s84, %s87
    %p93 = scmp.eq.s32.totalorder %s10, 0
    %p94 = por %p92, %p93
    %p95 = scmp.ne.s32.totalorder %s84, %s87
    %p96 = scmp.eq.s32.totalorder %s15, 1
    %p97 = por %p95, %p96
    %p98 = scmp.ne.s32.totalorder %s87, %s88
    %p99 = scmp.eq.s32.totalorder %s15, 0
    %p100 = por %p98, %p99
    %p101 = scmp.ne.s32.totalorder %s87, %s88
    %p102 = scmp.eq.s32.totalorder %s16, 1
    %p103 = por %p101, %p102
    %p105 = scmp.ne.s32.totalorder %s88, %s104
    %p106 = scmp.eq.s32.totalorder %s16, 0
    %p107 = por %p105, %p106
    %s108 = ssub.s32 %s17, %s29
    %p109 = scmp.eq.s32.totalorder %s108, 0
    %s111 = sadd.s32 %s110, 1
    %s112 = scalar_select %p109, %s110, %s111
    %p115 = pneg %p109
    %p116 = scmp.eq.s32.totalorder %s10, 1
    %p117 = por %p115, %p116
    %p118 = scmp.ne.s32.totalorder %s110, %s113
    %p119 = scmp.eq.s32.totalorder %s10, 0
    %p120 = por %p118, %p119
    %p121 = scmp.ne.s32.totalorder %s110, %s113
    %p122 = scmp.eq.s32.totalorder %s15, 1
    %p123 = por %p121, %p122
    %p124 = scmp.ne.s32.totalorder %s113, %s114
    %p125 = scmp.eq.s32.totalorder %s15, 0
    %p126 = por %p124, %p125
    %p127 = scmp.ne.s32.totalorder %s113, %s114
    %p128 = scmp.eq.s32.totalorder %s16, 1
    %p129 = por %p127, %p128
    %p131 = scmp.ne.s32.totalorder %s114, %s130
    %p132 = scmp.eq.s32.totalorder %s16, 0
    %p133 = por %p131, %p132
    %s134 = ssub.s32 %s17, %s29
    %p135 = scmp.eq.s32.totalorder %s134, 0
    %s137 = sadd.s32 %s136, 1
    %s138 = scalar_select %p135, %s136, %s137
    %p141 = pneg %p135
    %p142 = scmp.eq.s32.totalorder %s10, 1
    %p143 = por %p141, %p142
    %p144 = scmp.ne.s32.totalorder %s136, %s139
    %p145 = scmp.eq.s32.totalorder %s10, 0
    %p146 = por %p144, %p145
    %p147 = scmp.ne.s32.totalorder %s136, %s139
    %p148 = scmp.eq.s32.totalorder %s15, 1
    %p149 = por %p147, %p148
    %p150 = scmp.ne.s32.totalorder %s139, %s140
    %p151 = scmp.eq.s32.totalorder %s15, 0
    %p152 = por %p150, %p151
    %p153 = scmp.ne.s32.totalorder %s139, %s140
    %p154 = scmp.eq.s32.totalorder %s16, 1
    %p155 = por %p153, %p154
    %p157 = scmp.ne.s32.totalorder %s140, %s156
    %p158 = scmp.eq.s32.totalorder %s16, 0
    %p159 = por %p157, %p158
    %p160 = scmp.le.s32.totalorder 1, %s10
    %p161 = scmp.lt.s32.totalorder %s10, 3
    %p162 = pnand %p160, %p161
    %p163 = pneg %p162
    // Predicated region
    $region9: #{upconv_block.1} parent=5 // pred_check
      _
    $region10: #{upconv_block.1} parent=5 // pred_check_branch
      %165 = sbr.rel (%p162) target = $region12
    $region11: #{upconv_block.1} parent=5 // pred_region
      %s166 = ssub.s32 %s10, 1
      // Predicated region
      $region13: #{upconv_block.1} parent=11 // pred_check
        %p167 = pneg %p74
      $region14: #{upconv_block.1} parent=11 // pred_check_branch
        %169 = sbr.rel (%p167) target = $region16
      $region15: #{upconv_block.1} parent=11 // pred_region
        %p170 = scmp.lt.s32.totalorder %s19, 0
        %s171 = scalar_select %p170, %s19, 0
        %s172 = smul.addr %s171, 6
        %s173 = smul.addr %s172, 8
        %s174 = scalar_lea.vmem %s1, %s173
      $region16: #{upconv_block.1} parent=11 // pred_fallthru
        _
      // Predicated region
      $region17: #{upconv_block.1} parent=11 // pred_check
        %p175 = pneg %p100
      $region18: #{upconv_block.1} parent=11 // pred_check_branch
        %177 = sbr.rel (%p175) target = $region20
      $region19: #{upconv_block.1} parent=11 // pred_region
        %p178 = scmp.lt.s32.totalorder %s19, 0
        %s179 = scalar_select %p178, %s19, 0
        %s180 = smul.addr %s179, 8
        %s181 = scalar_lea.vmem %s2, %s180
      $region20: #{upconv_block.1} parent=11 // pred_fallthru
        _
      // Predicated region
      $region21: #{upconv_block.1} parent=11 // pred_check
        %p182 = pneg %p126
      $region22: #{upconv_block.1} parent=11 // pred_check_branch
        %184 = sbr.rel (%p182) target = $region24
      $region23: #{upconv_block.1} parent=11 // pred_region
        %p185 = scmp.lt.s32.totalorder %s19, 0
        %s186 = scalar_select %p185, %s19, 0
        %s187 = smul.addr %s186, 8
        %s188 = scalar_lea.vmem %s3, %s187
      $region24: #{upconv_block.1} parent=11 // pred_fallthru
        _
    $region12: #{upconv_block.1} parent=5 // pred_fallthru
      _
    %p189 = scmp.lt.s32.totalorder %s10, 2
    // Predicated region
    $region25: #{upconv_block.1} parent=5 // pred_check
      %p190 = pneg %p189
    $region26: #{upconv_block.1} parent=5 // pred_check_branch
      %192 = sbr.rel (%p190) target = $region28
    $region27: #{upconv_block.1} parent=5 // pred_region
      // Predicated region
      $region29: #{upconv_block.1} parent=27 // pred_check
        %p193 = pneg %p42
      $region30: #{upconv_block.1} parent=27 // pred_check_branch
        %195 = sbr.rel (%p193) target = $region32
      $region31: #{upconv_block.1} parent=27 // pred_region
        %p196 = scmp.lt.s32.totalorder %s18, 1
        %s197 = scalar_select %p196, %s18, 1
        %s198 = smul.addr %s197, 3
        %s199 = smul.addr %s198, 4
        %s200 = scalar_lea.vmem %s0, %s199
      $region32: #{upconv_block.1} parent=27 // pred_fallthru
        _
    $region28: #{upconv_block.1} parent=5 // pred_fallthru
      _
    %p201 = scmp.le.s32.totalorder 1, %s10
    %p202 = scmp.lt.s32.totalorder %s10, 3
    %p203 = pnand %p201, %p202
    %p204 = pneg %p203
    // Predicated region
    $region33: #{upconv_block.1} parent=5 // pred_check
      _
    $region34: #{upconv_block.1} parent=5 // pred_check_branch
      %206 = sbr.rel (%p203) target = $region36
    $region35: #{upconv_block.1} parent=5 // pred_region
      %s207 = ssub.s32 %s10, 1
      %p208 = scmp.lt.s32.totalorder %s20, 1
      %s209 = scalar_select %p208, %s20, 1
      %s210 = smul.addr %s209, 3
      %s211 = smul.addr %s210, 4
      %s212 = scalar_lea.vmem %s0, %s211
      %p213 = pneg %p48
      %p214 = pneg %p45
      %p215 = scmp.lt.s32.totalorder %s19, 0
      %s216 = scalar_select %p215, %s19, 0
      %s217 = smul.addr %s216, 6
      %s218 = smul.addr %s217, 8
      %s219 = scalar_lea.vmem %s1, %s218
      %p220 = pneg %p74
      %p221 = pneg %p71
      %p222 = scmp.lt.s32.totalorder %s19, 0
      %s223 = scalar_select %p222, %s19, 0
      %s224 = smul.addr %s223, 8
      %s225 = scalar_lea.vmem %s2, %s224
      %p226 = pneg %p100
      %p227 = pneg %p97
      %p228 = scmp.lt.s32.totalorder %s19, 0
      %s229 = scalar_select %p228, %s19, 0
      %s230 = smul.addr %s229, 8
      %s231 = scalar_lea.vmem %s3, %s230
      %p232 = pneg %p126
      %p233 = pneg %p123
      %p234 = pneg %p152
      %p235 = pneg %p149
      %p236 = scmp.lt.s32.totalorder %s19, 0
      %s237 = scalar_select %p236, %s19, 0
      %s238 = smul.addr %s237, 3
      %s239 = smul.addr %s238, 8
      %s240 = scalar_lea.vmem %s4, %s239
      %p241 = scmp.lt.s32.totalorder %s20, 1
      %s242 = scalar_select %p241, %s20, 1
      %s243 = smul.addr %s242, 3
      %s244 = smul.addr %s243, 4
      %s245 = scalar_lea.vmem %s0, %s244
      %p246 = scmp.lt.s32.totalorder %s19, 0
      %s247 = scalar_select %p246, %s19, 0
      %s248 = smul.addr %s247, 6
      %s249 = smul.addr %s248, 8
      %s250 = scalar_lea.vmem %s1, %s249
      %p251 = scmp.lt.s32.totalorder %s19, 0
      %s252 = scalar_select %p251, %s19, 0
      %s253 = smul.addr %s252, 8
      %s254 = scalar_lea.vmem %s2, %s253
      %p255 = scmp.lt.s32.totalorder %s19, 0
      %s256 = scalar_select %p255, %s19, 0
      %s257 = smul.addr %s256, 8
      %s258 = scalar_lea.vmem %s3, %s257
      %p259 = scmp.lt.s32.totalorder %s19, 0
      %s260 = scalar_select %p259, %s19, 0
      %s261 = smul.addr %s260, 3
      %s262 = smul.addr %s261, 8
      %s263 = scalar_lea.vmem %s4, %s262
      %v264 = vld [vmem:[%s245] sm:$0xff]
      %v265 = vld [vmem:[%s245 + $0x8] sm:$0xf]
      %v267 = vcombine.high %v264, %v264
      %269 = vst [vmem:[#allocation2] sm:$0xf] %v264
      %270 = vst [vmem:[#allocation2 + $0x8] sm:$0xf] %v267
      %vm271 = vcmask 257024
      %272 = vst.msk [vmem:[#allocation2 + $0x10] sm:$0xf] %vm271, %v265
      %v273 = vld [vmem:[%s245] sm:$0xff]
      %v274 = vld [vmem:[%s245 + $0x8] sm:$0xf]
      %v277 = vcombine.low %v273, %v273
      %v278 = vcombine.low %v274, %v274
      %279 = vrot.lane.b32.xlu0 %v277, 110
      %v280 = vpop.permute.xlu0 %279
      %281 = vrot.lane.b32.xlu0 %v273, 110
      %v282 = vpop.permute.xlu0 %281
      %283 = vrot.lane.b32.xlu0 %v278, 110
      %v284 = vpop.permute.xlu0 %283
      %vm285 = vcmask 900096
      %v286 = vsel %vm285, %v280, %v282
      %v287 = vsel %vm285, %v282, %v284
      %291 = vst [vmem:[#allocation2] sm:$0xf0] %v286
      %292 = vst [vmem:[#allocation2 + $0x8] sm:$0xf0] %v287
      %vm293 = vcmask 261124
      %294 = vst.msk [vmem:[#allocation2 + $0x10] sm:$0xf0] %vm293, %v284
      %v295 = vld [vmem:[%s245] sm:$0xff]
      %v296 = vld [vmem:[%s245 + $0x8] sm:$0xf]
      %v299 = vcombine.high %v295, %v295
      %300 = vrot.lane.b32.xlu0 %v295, 92
      %v301 = vpop.permute.xlu0 %300
      %302 = vrot.lane.b32.xlu0 %v299, 92
      %v303 = vpop.permute.xlu0 %302
      %304 = vrot.lane.b32.xlu0 %v296, 92
      %v305 = vpop.permute.xlu0 %304
      %vm306 = vcmask 752640
      %v307 = vsel %vm306, %v301, %v303
      %v308 = vsel %vm306, %v303, %v305
      %312 = vst [vmem:[#allocation2 + $0x18] sm:$0xf] %v307
      %313 = vst [vmem:[#allocation2 + $0x20] sm:$0xf] %v308
      %314 = vst.msk [vmem:[#allocation2 + $0x28] sm:$0xf] %vm271, %v305
      %v315 = vld [vmem:[#allocation2] sm:$0xff]
      %v316 = vld [vmem:[#allocation2 + $0x8] sm:$0xff]
      %v317 = vld [vmem:[#allocation2 + $0x10] sm:$0xff]
      %v318 = vld [vmem:[#allocation2 + $0x18] sm:$0xf]
      %v319 = vld [vmem:[#allocation2 + $0x20] sm:$0xf]
      %v320 = vld [vmem:[#allocation2 + $0x28] sm:$0xf]
      %v321 = vld [vmem:[%s250] sm:$0xff]
      %v322 = vld [vmem:[%s250 + $0x8] sm:$0xff]
      %vm323 = vcmask 97280
      %v325 = vsel %vm323, %v321, 0
      %v328 = vsel %vm323, %v322, 0
      %vm330 = vcmask 1043456
      %v332 = vsel %vm330, %v318, 0
      %v335 = vsel %vm330, %v319, 0
      %v338 = vsel %vm330, %v320, 0
      %340 = vmatprep.subr.mxu0 %v316
      %341 = vmatpush1.msra.mxu0 %v315
      %342 = vmatprep.subr.mxu0 %v335
      %343 = vmatpush1.msra.mxu0 %v332
      %344 = vmatprep.subr.mxu0 0.0
      %345 = vmatpush1.msra.mxu0 0.0
      %346 = vmatprep.subr.mxu0 0.0
      %347 = vmatpush1.msra.mxu0 0.0
      %348 = vmatprep.subr.mxu0 0.0
      %349 = vmatpush1.msra.mxu0 0.0
      %350 = vmatprep.subr.mxu0 0.0
      %351 = vmatpush1.msra.mxu0 0.0
      %352 = vmatprep.subr.mxu0 0.0
      %353 = vmatpush1.msra.mxu0 0.0
      %354 = vmatprep.subr.mxu0 0.0
      %355 = vmatpush1.msra.mxu0 0.0
      %356 = vmatprep.subr.mxu0 0.0
      %357 = vmatpush1.msra.mxu0 0.0
      %358 = vmatprep.subr.mxu0 0.0
      %359 = vmatpush1.msra.mxu0 0.0
      %360 = vmatprep.subr.mxu0 0.0
      %361 = vmatpush1.msra.mxu0 0.0
      %362 = vmatprep.subr.mxu0 0.0
      %363 = vmatpush1.msra.mxu0 0.0
      %364 = vmatprep.subr.mxu0 0.0
      %365 = vmatpush1.msra.mxu0 0.0
      %366 = vmatprep.subr.mxu0 0.0
      %367 = vmatpush1.msra.mxu0 0.0
      %368 = vmatprep.subr.mxu0 0.0
      %369 = vmatpush1.msra.mxu0 0.0
      %370 = vmatprep.subr.mxu0 0.0
      %371 = vmatpush1.msra.mxu0 0.0
      %372 = vmatprep.subr.mxu0 0.0
      %373 = vmatpush1.msra.mxu0 0.0
      %374 = vmatprep.subr.mxu0 0.0
      %375 = vmatpush1.msra.mxu0 0.0
      %376 = vmatprep.subr.mxu0 0.0
      %377 = vmatpush1.msra.mxu0 0.0
      %378 = vmatprep.subr.mxu0 0.0
      %379 = vmatpush1.msra.mxu0 0.0
      %380 = vmatprep.subr.mxu0 0.0
      %381 = vmatpush1.msra.mxu0 0.0
      %382 = vmatprep.subr.mxu0 0.0
      %383 = vmatpush1.msra.mxu0 0.0
      %384 = vmatprep.subr.mxu0 0.0
      %385 = vmatpush1.msra.mxu0 0.0
      %386 = vmatprep.subr.mxu0 0.0
      %387 = vmatpush1.msra.mxu0 0.0
      %388 = vmatprep.subr.mxu0 0.0
      %389 = vmatpush1.msra.mxu0 0.0
      %390 = vmatprep.subr.mxu0 0.0
      %391 = vmatpush1.msra.mxu0 0.0
      %392 = vmatprep.subr.mxu0 0.0
      %393 = vmatpush1.msra.mxu0 0.0
      %394 = vmatprep.subr.mxu0 0.0
      %395 = vmatpush1.msra.mxu0 0.0
      %396 = vmatprep.subr.mxu0 0.0
      %397 = vmatpush1.msra.mxu0 0.0
      %398 = vmatprep.subr.mxu0 0.0
      %399 = vmatpush1.msra.mxu0 0.0
      %400 = vmatprep.subr.mxu0 0.0
      %401 = vmatpush1.msra.mxu0 0.0
      %402 = vmatprep.subr.mxu0 0.0
      %403 = vmatpush1.msra.mxu0 0.0
      %404 = vmatprep.mubr.f32.mxu0 0.0
      %405 = vmatmul.mubr.f32.gmra.mrb[0].mxu0 %v325
      %v406 = vpop.f32.mrb[0].mxu0
      %v407 = vadd.f32 0.0, %v406
      %v408 = vpop.f32.mrb[0].mxu0
      %v409 = vadd.f32 0.0, %v408
      %410 = vmatprep.mubr.f32.mxu0 0.0
      %411 = vmatmul.mubr.f32.gmra.mrb[0].mxu0 %v328
      %v412 = vpop.f32.mrb[0].mxu0
      %v413 = vadd.f32 0.0, %v412
      %v414 = vpop.f32.mrb[0].mxu0
      %v415 = vadd.f32 0.0, %v414
      %416 = vdwg.mxu0
      %417 = vmatprep.subr.mxu0 0.0
      %418 = vmatpush1.msra.mxu0 %v317
      %419 = vmatprep.subr.mxu0 0.0
      %420 = vmatpush1.msra.mxu0 %v338
      %421 = vmatprep.subr.mxu0 0.0
      %422 = vmatpush1.msra.mxu0 0.0
      %423 = vmatprep.subr.mxu0 0.0
      %424 = vmatpush1.msra.mxu0 0.0
      %425 = vmatprep.subr.mxu0 0.0
      %426 = vmatpush1.msra.mxu0 0.0
      %427 = vmatprep.subr.mxu0 0.0
      %428 = vmatpush1.msra.mxu0 0.0
      %429 = vmatprep.subr.mxu0 0.0
      %430 = vmatpush1.msra.mxu0 0.0
      %431 = vmatprep.subr.mxu0 0.0
      %432 = vmatpush1.msra.mxu0 0.0
      %433 = vmatprep.subr.mxu0 0.0
      %434 = vmatpush1.msra.mxu0 0.0
      %435 = vmatprep.subr.mxu0 0.0
      %436 = vmatpush1.msra.mxu0 0.0
      %437 = vmatprep.subr.mxu0 0.0
      %438 = vmatpush1.msra.mxu0 0.0
      %439 = vmatprep.subr.mxu0 0.0
      %440 = vmatpush1.msra.mxu0 0.0
      %441 = vmatprep.subr.mxu0 0.0
      %442 = vmatpush1.msra.mxu0 0.0
      %443 = vmatprep.subr.mxu0 0.0
      %444 = vmatpush1.msra.mxu0 0.0
      %445 = vmatprep.subr.mxu0 0.0
      %446 = vmatpush1.msra.mxu0 0.0
      %447 = vmatprep.subr.mxu0 0.0
      %448 = vmatpush1.msra.mxu0 0.0
      %449 = vmatprep.subr.mxu0 0.0
      %450 = vmatpush1.msra.mxu0 0.0
      %451 = vmatprep.subr.mxu0 0.0
      %452 = vmatpush1.msra.mxu0 0.0
      %453 = vmatprep.subr.mxu0 0.0
      %454 = vmatpush1.msra.mxu0 0.0
      %455 = vmatprep.subr.mxu0 0.0
      %456 = vmatpush1.msra.mxu0 0.0
      %457 = vmatprep.subr.mxu0 0.0
      %458 = vmatpush1.msra.mxu0 0.0
      %459 = vmatprep.subr.mxu0 0.0
      %460 = vmatpush1.msra.mxu0 0.0
      %461 = vmatprep.subr.mxu0 0.0
      %462 = vmatpush1.msra.mxu0 0.0
      %463 = vmatprep.subr.mxu0 0.0
      %464 = vmatpush1.msra.mxu0 0.0
      %465 = vmatprep.subr.mxu0 0.0
      %466 = vmatpush1.msra.mxu0 0.0
      %467 = vmatprep.subr.mxu0 0.0
      %468 = vmatpush1.msra.mxu0 0.0
      %469 = vmatprep.subr.mxu0 0.0
      %470 = vmatpush1.msra.mxu0 0.0
      %471 = vmatprep.subr.mxu0 0.0
      %472 = vmatpush1.msra.mxu0 0.0
      %473 = vmatprep.subr.mxu0 0.0
      %474 = vmatpush1.msra.mxu0 0.0
      %475 = vmatprep.subr.mxu0 0.0
      %476 = vmatpush1.msra.mxu0 0.0
      %477 = vmatprep.subr.mxu0 0.0
      %478 = vmatpush1.msra.mxu0 0.0
      %479 = vmatprep.subr.mxu0 0.0
      %480 = vmatpush1.msra.mxu0 0.0
      %481 = vmatprep.mubr.f32.mxu0 0.0
      %482 = vmatmul.mubr.f32.gmra.mrb[0].mxu0 %v325
      %v483 = vpop.f32.mrb[0].mxu0
      %v484 = vadd.f32 0.0, %v483
      %v485 = vpop.f32.mrb[0].mxu0
      %486 = vmatprep.mubr.f32.mxu0 0.0
      %487 = vmatmul.mubr.f32.gmra.mrb[0].mxu0 %v328
      %v488 = vpop.f32.mrb[0].mxu0
      %v489 = vadd.f32 0.0, %v488
      %v490 = vpop.f32.mrb[0].mxu0
      %491 = vdwg.mxu0
      %s492 = scalar_lea.vmem %s250, 16
      %v493 = vld [vmem:[%s492] sm:$0xff]
      %v494 = vld [vmem:[%s492 + $0x8] sm:$0xff]
      %v496 = vsel %vm323, %v493, 0
      %v499 = vsel %vm323, %v494, 0
      %501 = vmatprep.subr.mxu0 %v316
      %502 = vmatpush1.msra.mxu0 %v315
      %503 = vmatprep.subr.mxu0 %v335
      %504 = vmatpush1.msra.mxu0 %v332
      %505 = vmatprep.subr.mxu0 0.0
      %506 = vmatpush1.msra.mxu0 0.0
      %507 = vmatprep.subr.mxu0 0.0
      %508 = vmatpush1.msra.mxu0 0.0
      %509 = vmatprep.subr.mxu0 0.0
      %510 = vmatpush1.msra.mxu0 0.0
      %511 = vmatprep.subr.mxu0 0.0
      %512 = vmatpush1.msra.mxu0 0.0
      %513 = vmatprep.subr.mxu0 0.0
      %514 = vmatpush1.msra.mxu0 0.0
      %515 = vmatprep.subr.mxu0 0.0
      %516 = vmatpush1.msra.mxu0 0.0
      %517 = vmatprep.subr.mxu0 0.0
      %518 = vmatpush1.msra.mxu0 0.0
      %519 = vmatprep.subr.mxu0 0.0
      %520 = vmatpush1.msra.mxu0 0.0
      %521 = vmatprep.subr.mxu0 0.0
      %522 = vmatpush1.msra.mxu0 0.0
      %523 = vmatprep.subr.mxu0 0.0
      %524 = vmatpush1.msra.mxu0 0.0
      %525 = vmatprep.subr.mxu0 0.0
      %526 = vmatpush1.msra.mxu0 0.0
      %527 = vmatprep.subr.mxu0 0.0
      %528 = vmatpush1.msra.mxu0 0.0
      %529 = vmatprep.subr.mxu0 0.0
      %530 = vmatpush1.msra.mxu0 0.0
      %531 = vmatprep.subr.mxu0 0.0
      %532 = vmatpush1.msra.mxu0 0.0
      %533 = vmatprep.subr.mxu0 0.0
      %534 = vmatpush1.msra.mxu0 0.0
      %535 = vmatprep.subr.mxu0 0.0
      %536 = vmatpush1.msra.mxu0 0.0
      %537 = vmatprep.subr.mxu0 0.0
      %538 = vmatpush1.msra.mxu0 0.0
      %539 = vmatprep.subr.mxu0 0.0
      %540 = vmatpush1.msra.mxu0 0.0
      %541 = vmatprep.subr.mxu0 0.0
      %542 = vmatpush1.msra.mxu0 0.0
      %543 = vmatprep.subr.mxu0 0.0
      %544 = vmatpush1.msra.mxu0 0.0
      %545 = vmatprep.subr.mxu0 0.0
      %546 = vmatpush1.msra.mxu0 0.0
      %547 = vmatprep.subr.mxu0 0.0
      %548 = vmatpush1.msra.mxu0 0.0
      %549 = vmatprep.subr.mxu0 0.0
      %550 = vmatpush1.msra.mxu0 0.0
      %551 = vmatprep.subr.mxu0 0.0
      %552 = vmatpush1.msra.mxu0 0.0
      %553 = vmatprep.subr.mxu0 0.0
      %554 = vmatpush1.msra.mxu0 0.0
      %555 = vmatprep.subr.mxu0 0.0
      %556 = vmatpush1.msra.mxu0 0.0
      %557 = vmatprep.subr.mxu0 0.0
      %558 = vmatpush1.msra.mxu0 0.0
      %559 = vmatprep.subr.mxu0 0.0
      %560 = vmatpush1.msra.mxu0 0.0
      %561 = vmatprep.subr.mxu0 0.0
      %562 = vmatpush1.msra.mxu0 0.0
      %563 = vmatprep.subr.mxu0 0.0
      %564 = vmatpush1.msra.mxu0 0.0
      %565 = vmatprep.mubr.f32.mxu0 0.0
      %566 = vmatmul.mubr.f32.gmra.mrb[0].mxu0 %v496
      %v567 = vpop.f32.mrb[0].mxu0
      %v568 = vadd.f32 0.0, %v567
      %v569 = vpop.f32.mrb[0].mxu0
      %v570 = vadd.f32 0.0, %v569
      %571 = vmatprep.mubr.f32.mxu0 0.0
      %572 = vmatmul.mubr.f32.gmra.mrb[0].mxu0 %v499
      %v573 = vpop.f32.mrb[0].mxu0
      %v574 = vadd.f32 0.0, %v573
      %v575 = vpop.f32.mrb[0].mxu0
      %v576 = vadd.f32 0.0, %v575
      %577 = vdwg.mxu0
      %578 = vmatprep.subr.mxu0 0.0
      %579 = vmatpush1.msra.mxu0 %v317
      %580 = vmatprep.subr.mxu0 0.0
      %581 = vmatpush1.msra.mxu0 %v338
      %582 = vmatprep.subr.mxu0 0.0
      %583 = vmatpush1.msra.mxu0 0.0
      %584 = vmatprep.subr.mxu0 0.0
      %585 = vmatpush1.msra.mxu0 0.0
      %586 = vmatprep.subr.mxu0 0.0
      %587 = vmatpush1.msra.mxu0 0.0
      %588 = vmatprep.subr.mxu0 0.0
      %589 = vmatpush1.msra.mxu0 0.0
      %590 = vmatprep.subr.mxu0 0.0
      %591 = vmatpush1.msra.mxu0 0.0
      %592 = vmatprep.subr.mxu0 0.0
      %593 = vmatpush1.msra.mxu0 0.0
      %594 = vmatprep.subr.mxu0 0.0
      %595 = vmatpush1.msra.mxu0 0.0
      %596 = vmatprep.subr.mxu0 0.0
      %597 = vmatpush1.msra.mxu0 0.0
      %598 = vmatprep.subr.mxu0 0.0
      %599 = vmatpush1.msra.mxu0 0.0
      %600 = vmatprep.subr.mxu0 0.0
      %601 = vmatpush1.msra.mxu0 0.0
      %602 = vmatprep.subr.mxu0 0.0
      %603 = vmatpush1.msra.mxu0 0.0
      %604 = vmatprep.subr.mxu0 0.0
      %605 = vmatpush1.msra.mxu0 0.0
      %606 = vmatprep.subr.mxu0 0.0
      %607 = vmatpush1.msra.mxu0 0.0
      %608 = vmatprep.subr.mxu0 0.0
      %609 = vmatpush1.msra.mxu0 0.0
      %610 = vmatprep.subr.mxu0 0.0
      %611 = vmatpush1.msra.mxu0 0.0
      %612 = vmatprep.subr.mxu0 0.0
      %613 = vmatpush1.msra.mxu0 0.0
      %614 = vmatprep.subr.mxu0 0.0
      %615 = vmatpush1.msra.mxu0 0.0
      %616 = vmatprep.subr.mxu0 0.0
      %617 = vmatpush1.msra.mxu0 0.0
      %618 = vmatprep.subr.mxu0 0.0
      %619 = vmatpush1.msra.mxu0 0.0
      %620 = vmatprep.subr.mxu0 0.0
      %621 = vmatpush1.msra.mxu0 0.0
      %622 = vmatprep.subr.mxu0 0.0
      %623 = vmatpush1.msra.mxu0 0.0
      %624 = vmatprep.subr.mxu0 0.0
      %625 = vmatpush1.msra.mxu0 0.0
      %626 = vmatprep.subr.mxu0 0.0
      %627 = vmatpush1.msra.mxu0 0.0
      %628 = vmatprep.subr.mxu0 0.0
      %629 = vmatpush1.msra.mxu0 0.0
      %630 = vmatprep.subr.mxu0 0.0
      %631 = vmatpush1.msra.mxu0 0.0
      %632 = vmatprep.subr.mxu0 0.0
      %633 = vmatpush1.msra.mxu0 0.0
      %634 = vmatprep.subr.mxu0 0.0
      %635 = vmatpush1.msra.mxu0 0.0
      %636 = vmatprep.subr.mxu0 0.0
      %637 = vmatpush1.msra.mxu0 0.0
      %638 = vmatprep.subr.mxu0 0.0
      %639 = vmatpush1.msra.mxu0 0.0
      %640 = vmatprep.subr.mxu0 0.0
      %641 = vmatpush1.msra.mxu0 0.0
      %642 = vmatprep.mubr.f32.mxu0 0.0
      %643 = vmatmul.mubr.f32.gmra.mrb[0].mxu0 %v496
      %v644 = vpop.f32.mrb[0].mxu0
      %v645 = vadd.f32 0.0, %v644
      %v646 = vpop.f32.mrb[0].mxu0
      %647 = vmatprep.mubr.f32.mxu0 0.0
      %648 = vmatmul.mubr.f32.gmra.mrb[0].mxu0 %v499
      %v649 = vpop.f32.mrb[0].mxu0
      %v650 = vadd.f32 0.0, %v649
      %v651 = vpop.f32.mrb[0].mxu0
      %652 = vdwg.mxu0
      %s653 = scalar_lea.vmem %s250, 32
      %v654 = vld [vmem:[%s653] sm:$0xff]
      %v655 = vld [vmem:[%s653 + $0x8] sm:$0xff]
      %v657 = vsel %vm323, %v654, 0
      %v660 = vsel %vm323, %v655, 0
      %662 = vmatprep.subr.mxu0 %v316
      %663 = vmatpush1.msra.mxu0 %v315
      %664 = vmatprep.subr.mxu0 %v335
      %665 = vmatpush1.msra.mxu0 %v332
      %666 = vmatprep.subr.mxu0 0.0
      %667 = vmatpush1.msra.mxu0 0.0
      %668 = vmatprep.subr.mxu0 0.0
      %669 = vmatpush1.msra.mxu0 0.0
      %670 = vmatprep.subr.mxu0 0.0
      %671 = vmatpush1.msra.mxu0 0.0
      %672 = vmatprep.subr.mxu0 0.0
      %673 = vmatpush1.msra.mxu0 0.0
      %674 = vmatprep.subr.mxu0 0.0
      %675 = vmatpush1.msra.mxu0 0.0
      %676 = vmatprep.subr.mxu0 0.0
      %677 = vmatpush1.msra.mxu0 0.0
      %678 = vmatprep.subr.mxu0 0.0
      %679 = vmatpush1.msra.mxu0 0.0
      %680 = vmatprep.subr.mxu0 0.0
      %681 = vmatpush1.msra.mxu0 0.0
      %682 = vmatprep.subr.mxu0 0.0
      %683 = vmatpush1.msra.mxu0 0.0
      %684 = vmatprep.subr.mxu0 0.0
      %685 = vmatpush1.msra.mxu0 0.0
      %686 = vmatprep.subr.mxu0 0.0
      %687 = vmatpush1.msra.mxu0 0.0
      %688 = vmatprep.subr.mxu0 0.0
      %689 = vmatpush1.msra.mxu0 0.0
      %690 = vmatprep.subr.mxu0 0.0
      %691 = vmatpush1.msra.mxu0 0.0
      %692 = vmatprep.subr.mxu0 0.0
      %693 = vmatpush1.msra.mxu0 0.0
      %694 = vmatprep.subr.mxu0 0.0
      %695 = vmatpush1.msra.mxu0 0.0
      %696 = vmatprep.subr.mxu0 0.0
      %697 = vmatpush1.msra.mxu0 0.0
      %698 = vmatprep.subr.mxu0 0.0
      %699 = vmatpush1.msra.mxu0 0.0
      %700 = vmatprep.subr.mxu0 0.0
      %701 = vmatpush1.msra.mxu0 0.0
      %702 = vmatprep.subr.mxu0 0.0
      %703 = vmatpush1.msra.mxu0 0.0
      %704 = vmatprep.subr.mxu0 0.0
      %705 = vmatpush1.msra.mxu0 0.0
      %706 = vmatprep.subr.mxu0 0.0
      %707 = vmatpush1.msra.mxu0 0.0
      %708 = vmatprep.subr.mxu0 0.0
      %709 = vmatpush1.msra.mxu0 0.0
      %710 = vmatprep.subr.mxu0 0.0
      %711 = vmatpush1.msra.mxu0 0.0
      %712 = vmatprep.subr.mxu0 0.0
      %713 = vmatpush1.msra.mxu0 0.0
      %714 = vmatprep.subr.mxu0 0.0
      %715 = vmatpush1.msra.mxu0 0.0
      %716 = vmatprep.subr.mxu0 0.0
      %717 = vmatpush1.msra.mxu0 0.0
      %718 = vmatprep.subr.mxu0 0.0
      %719 = vmatpush1.msra.mxu0 0.0
      %720 = vmatprep.subr.mxu0 0.0
      %721 = vmatpush1.msra.mxu0 0.0
      %722 = vmatprep.subr.mxu0 0.0
      %723 = vmatpush1.msra.mxu0 0.0
      %724 = vmatprep.subr.mxu0 0.0
      %725 = vmatpush1.msra.mxu0 0.0
      %726 = vmatprep.mubr.f32.mxu0 0.0
      %727 = vmatmul.mubr.f32.gmra.mrb[0].mxu0 %v657
      %v728 = vpop.f32.mrb[0].mxu0
      %v729 = vadd.f32 0.0, %v728
      %v730 = vpop.f32.mrb[0].mxu0
      %v731 = vadd.f32 0.0, %v730
      %732 = vmatprep.mubr.f32.mxu0 0.0
      %733 = vmatmul.mubr.f32.gmra.mrb[0].mxu0 %v660
      %v734 = vpop.f32.mrb[0].mxu0
      %v735 = vadd.f32 0.0, %v734
      %v736 = vpop.f32.mrb[0].mxu0
      %v737 = vadd.f32 0.0, %v736
      %738 = vdwg.mxu0
      %739 = vmatprep.subr.mxu0 0.0
      %740 = vmatpush1.msra.mxu0 %v317
      %741 = vmatprep.subr.mxu0 0.0
      %742 = vmatpush1.msra.mxu0 %v338
      %743 = vmatprep.subr.mxu0 0.0
      %744 = vmatpush1.msra.mxu0 0.0
      %745 = vmatprep.subr.mxu0 0.0
      %746 = vmatpush1.msra.mxu0 0.0
      %747 = vmatprep.subr.mxu0 0.0
      %748 = vmatpush1.msra.mxu0 0.0
      %749 = vmatprep.subr.mxu0 0.0
      %750 = vmatpush1.msra.mxu0 0.0
      %751 = vmatprep.subr.mxu0 0.0
      %752 = vmatpush1.msra.mxu0 0.0
      %753 = vmatprep.subr.mxu0 0.0
      %754 = vmatpush1.msra.mxu0 0.0
      %755 = vmatprep.subr.mxu0 0.0
      %756 = vmatpush1.msra.mxu0 0.0
      %757 = vmatprep.subr.mxu0 0.0
      %758 = vmatpush1.msra.mxu0 0.0
      %759 = vmatprep.subr.mxu0 0.0
      %760 = vmatpush1.msra.mxu0 0.0
      %761 = vmatprep.subr.mxu0 0.0
      %762 = vmatpush1.msra.mxu0 0.0
      %763 = vmatprep.subr.mxu0 0.0
      %764 = vmatpush1.msra.mxu0 0.0
      %765 = vmatprep.subr.mxu0 0.0
      %766 = vmatpush1.msra.mxu0 0.0
      %767 = vmatprep.subr.mxu0 0.0
      %768 = vmatpush1.msra.mxu0 0.0
      %769 = vmatprep.subr.mxu0 0.0
      %770 = vmatpush1.msra.mxu0 0.0
      %771 = vmatprep.subr.mxu0 0.0
      %772 = vmatpush1.msra.mxu0 0.0
      %773 = vmatprep.subr.mxu0 0.0
      %774 = vmatpush1.msra.mxu0 0.0
      %775 = vmatprep.subr.mxu0 0.0
      %776 = vmatpush1.msra.mxu0 0.0
      %777 = vmatprep.subr.mxu0 0.0
      %778 = vmatpush1.msra.mxu0 0.0
      %779 = vmatprep.subr.mxu0 0.0
      %780 = vmatpush1.msra.mxu0 0.0
      %781 = vmatprep.subr.mxu0 0.0
      %782 = vmatpush1.msra.mxu0 0.0
      %783 = vmatprep.subr.mxu0 0.0
      %784 = vmatpush1.msra.mxu0 0.0
      %785 = vmatprep.subr.mxu0 0.0
      %786 = vmatpush1.msra.mxu0 0.0
      %787 = vmatprep.subr.mxu0 0.0
      %788 = vmatpush1.msra.mxu0 0.0
      %789 = vmatprep.subr.mxu0 0.0
      %790 = vmatpush1.msra.mxu0 0.0
      %791 = vmatprep.subr.mxu0 0.0
      %792 = vmatpush1.msra.mxu0 0.0
      %793 = vmatprep.subr.mxu0 0.0
      %794 = vmatpush1.msra.mxu0 0.0
      %795 = vmatprep.subr.mxu0 0.0
      %796 = vmatpush1.msra.mxu0 0.0
      %797 = vmatprep.subr.mxu0 0.0
      %798 = vmatpush1.msra.mxu0 0.0
      %799 = vmatprep.subr.mxu0 0.0
      %800 = vmatpush1.msra.mxu0 0.0
      %801 = vmatprep.subr.mxu0 0.0
      %802 = vmatpush1.msra.mxu0 0.0
      %803 = vmatprep.mubr.f32.mxu0 0.0
      %804 = vmatmul.mubr.f32.gmra.mrb[0].mxu0 %v657
      %v805 = vpop.f32.mrb[0].mxu0
      %v806 = vadd.f32 0.0, %v805
      %v807 = vpop.f32.mrb[0].mxu0
      %808 = vmatprep.mubr.f32.mxu0 0.0
      %809 = vmatmul.mubr.f32.gmra.mrb[0].mxu0 %v660
      %v810 = vpop.f32.mrb[0].mxu0
      %v811 = vadd.f32 0.0, %v810
      %v812 = vpop.f32.mrb[0].mxu0
      %813 = vdwg.mxu0
      %820 = vrot.lane.b32.xlu0 %v568, 127
      %v821 = vpop.permute.xlu0 %820
      %822 = vrot.lane.b32.xlu0 %v570, 127
      %v823 = vpop.permute.xlu0 %822
      %824 = vrot.lane.b32.xlu0 %v645, 127
      %v825 = vpop.permute.xlu0 %824
      %826 = vrot.lane.b32.xlu0 %v574, 127
      %v827 = vpop.permute.xlu0 %826
      %828 = vrot.lane.b32.xlu0 %v576, 127
      %v829 = vpop.permute.xlu0 %828
      %830 = vrot.lane.b32.xlu0 %v650, 127
      %v831 = vpop.permute.xlu0 %830
      %vm832 = vcmask 1039360
      %v833 = vsel %vm832, %v821, %v823
      %v834 = vsel %vm832, %v823, %v825
      %v835 = vsel %vm832, %v827, %v829
      %v836 = vsel %vm832, %v829, %v831
      %vm843 = vcmask 252928
      %v844 = vsel %vm843, %v825, 0.0
      %v845 = vsel %vm843, %v831, 0.0
      %v846 = vadd.f32 %v407, %v833
      %v847 = vadd.f32 %v409, %v834
      %v848 = vadd.f32 %v484, %v844
      %v849 = vadd.f32 %v413, %v835
      %v850 = vadd.f32 %v415, %v836
      %v851 = vadd.f32 %v489, %v845
      %858 = vrot.lane.b32.xlu0 %v729, 127
      %v859 = vpop.permute.xlu0 %858
      %860 = vrot.lane.b32.xlu0 %v731, 127
      %v861 = vpop.permute.xlu0 %860
      %862 = vrot.lane.b32.xlu0 %v806, 127
      %v863 = vpop.permute.xlu0 %862
      %864 = vrot.lane.b32.xlu0 %v735, 127
      %v865 = vpop.permute.xlu0 %864
      %866 = vrot.lane.b32.xlu0 %v737, 127
      %v867 = vpop.permute.xlu0 %866
      %868 = vrot.lane.b32.xlu0 %v811, 127
      %v869 = vpop.permute.xlu0 %868
      %v870 = vsel %vm832, %v859, %v861
      %v871 = vsel %vm832, %v861, %v863
      %v872 = vsel %vm832, %v865, %v867
      %v873 = vsel %vm832, %v867, %v869
      %v880 = vsel %vm843, %v863, 0.0
      %v881 = vsel %vm843, %v869, 0.0
      %v882 = vadd.f32 %v846, %v870
      %v883 = vadd.f32 %v847, %v871
      %v884 = vadd.f32 %v848, %v880
      %v885 = vadd.f32 %v849, %v872
      %v886 = vadd.f32 %v850, %v873
      %v887 = vadd.f32 %v851, %v881
      %894 = vrot.lane.b32.xlu0 %v407, 127
      %v895 = vpop.permute.xlu0 %894
      %896 = vrot.lane.b32.xlu0 %v409, 127
      %v897 = vpop.permute.xlu0 %896
      %898 = vrot.lane.b32.xlu0 %v484, 127
      %v899 = vpop.permute.xlu0 %898
      %900 = vrot.lane.b32.xlu0 %v413, 127
      %v901 = vpop.permute.xlu0 %900
      %902 = vrot.lane.b32.xlu0 %v415, 127
      %v903 = vpop.permute.xlu0 %902
      %904 = vrot.lane.b32.xlu0 %v489, 127
      %v905 = vpop.permute.xlu0 %904
      %v906 = vsel %vm832, %v895, %v897
      %v907 = vsel %vm832, %v897, %v899
      %v908 = vsel %vm832, %v901, %v903
      %v909 = vsel %vm832, %v903, %v905
      %v916 = vsel %vm843, %v899, 0.0
      %v917 = vsel %vm843, %v905, 0.0
      %v918 = vadd.f32 %v906, %v833
      %v919 = vadd.f32 %v907, %v834
      %v920 = vadd.f32 %v916, %v844
      %v921 = vadd.f32 %v908, %v835
      %v922 = vadd.f32 %v909, %v836
      %v923 = vadd.f32 %v917, %v845
      %924 = vrot.lane.b32.xlu0 %v729, 126
      %v925 = vpop.permute.xlu0 %924
      %926 = vrot.lane.b32.xlu0 %v731, 126
      %v927 = vpop.permute.xlu0 %926
      %928 = vrot.lane.b32.xlu0 %v806, 126
      %v929 = vpop.permute.xlu0 %928
      %930 = vrot.lane.b32.xlu0 %v735, 126
      %v931 = vpop.permute.xlu0 %930
      %932 = vrot.lane.b32.xlu0 %v737, 126
      %v933 = vpop.permute.xlu0 %932
      %934 = vrot.lane.b32.xlu0 %v811, 126
      %v935 = vpop.permute.xlu0 %934
      %vm936 = vcmask 1031168
      %v937 = vsel %vm936, %v925, %v927
      %v938 = vsel %vm936, %v927, %v929
      %v939 = vsel %vm936, %v931, %v933
      %v940 = vsel %vm936, %v933, %v935
      %vm947 = vcmask 244736
      %v948 = vsel %vm947, %v929, 0.0
      %v949 = vsel %vm947, %v935, 0.0
      %v950 = vadd.f32 %v918, %v937
      %v951 = vadd.f32 %v919, %v938
      %v952 = vadd.f32 %v920, %v948
      %v953 = vadd.f32 %v921, %v939
      %v954 = vadd.f32 %v922, %v940
      %v955 = vadd.f32 %v923, %v949
      %s956 = smul.u32 %s20, 12
      %s957 = smul.addr %s956, 8
      %s958 = scalar_lea.vmem %s263, %s957
      %959 = vst [vmem:[%s958] sm:$0xff] %v882
      %960 = vst [vmem:[%s958 + $0x8] sm:$0xff] %v883
      %vm961 = vcmask 261120
      %962 = vst.msk [vmem:[%s958 + $0x10] sm:$0xff] %vm961, %v884
      %s963 = sadd.s32 6, %s956
      %s964 = smul.addr %s963, 8
      %s965 = scalar_lea.vmem %s263, %s964
      %966 = vst [vmem:[%s965] sm:$0xff] %v885
      %967 = vst [vmem:[%s965 + $0x8] sm:$0xff] %v886
      %968 = vst.msk [vmem:[%s965 + $0x10] sm:$0xff] %vm961, %v887
      %s969 = sadd.s32 3, %s956
      %s970 = smul.addr %s969, 8
      %s971 = scalar_lea.vmem %s263, %s970
      %972 = vst [vmem:[%s971] sm:$0xff] %v950
      %973 = vst [vmem:[%s971 + $0x8] sm:$0xff] %v951
      %974 = vst.msk [vmem:[%s971 + $0x10] sm:$0xff] %vm961, %v952
      %s975 = sadd.s32 9, %s956
      %s976 = smul.addr %s975, 8
      %s977 = scalar_lea.vmem %s263, %s976
      %978 = vst [vmem:[%s977] sm:$0xff] %v953
      %979 = vst [vmem:[%s977 + $0x8] sm:$0xff] %v954
      %980 = vst.msk [vmem:[%s977 + $0x10] sm:$0xff] %vm961, %v955
      %p981 = scmp.eq.s32.totalorder %s20, 1
      // Predicated region
      $region37: #{upconv_block.1} parent=35 // pred_check
        %p982 = pneg %p981
      $region38: #{upconv_block.1} parent=35 // pred_check_branch
        %984 = sbr.rel (%p982) target = $region40
      $region39: #{upconv_block.1} parent=35 // pred_region
        %v985 = vlaneseq
        %v986 = vand.u32 %v985, 127
        %v987 = vadd.s32 %v986, 128
        %v988 = vadd.s32 %v986, 256
        %vm989 = vcmp.lt.s32.totalorder %v986, 0
        %v990 = vsub.s32 0, %v986
        %v991 = vsel %vm989, %v990, %v986
        %v992 = vmul.u32.u64.compose %v991, 3817748708
        %v993 = vextract.low.u32 %v992
        %v994 = vextract.high.u32 %v992
        %v995 = vshrl.u32 %v994, 4
        %v996 = vmul.u32 %v995, 18
        %v997 = vsub.s32 %v991, %v996
        %v998 = vsub.s32 0, %v997
        %v999 = vsel %vm989, %v998, %v997
        %vm1000 = vcmp.lt.s32.totalorder %v987, 0
        %v1001 = vsub.s32 0, %v987
        %v1002 = vsel %vm1000, %v1001, %v987
        %v1003 = vmul.u32.u64.compose %v1002, 3817748708
        %v1004 = vextract.low.u32 %v1003
        %v1005 = vextract.high.u32 %v1003
        %v1006 = vshrl.u32 %v1005, 4
        %v1007 = vmul.u32 %v1006, 18
        %v1008 = vsub.s32 %v1002, %v1007
        %v1009 = vsub.s32 0, %v1008
        %v1010 = vsel %vm1000, %v1009, %v1008
        %vm1011 = vcmp.lt.s32.totalorder %v988, 0
        %v1012 = vsub.s32 0, %v988
        %v1013 = vsel %vm1011, %v1012, %v988
        %v1014 = vmul.u32.u64.compose %v1013, 3817748708
        %v1015 = vextract.low.u32 %v1014
        %v1016 = vextract.high.u32 %v1014
        %v1017 = vshrl.u32 %v1016, 4
        %v1018 = vmul.u32 %v1017, 18
        %v1019 = vsub.s32 %v1013, %v1018
        %v1020 = vsub.s32 0, %v1019
        %v1021 = vsel %vm1011, %v1020, %v1019
        %vm1022 = vcmp.ne.s32.totalorder %v999, 0
        %vm1023 = vcmp.ne.s32.totalorder %v1010, 0
        %vm1024 = vcmp.ne.s32.totalorder %v1021, 0
        %vm1025 = vcmp.lt.s32.totalorder %v999, 0
        %vm1026 = vcmp.lt.s32.totalorder %v1010, 0
        %vm1027 = vcmp.lt.s32.totalorder %v1021, 0
        %vm1028 = vmand %vm1025, %vm1022
        %vm1029 = vmand %vm1026, %vm1023
        %vm1030 = vmand %vm1027, %vm1024
        %v1031 = vadd.s32 %v999, 18
        %v1032 = vadd.s32 %v1010, 18
        %v1033 = vadd.s32 %v1021, 18
        %v1034 = vsel %vm1028, %v1031, %v999
        %v1035 = vsel %vm1029, %v1032, %v1010
        %v1036 = vsel %vm1030, %v1033, %v1021
        %vm1037 = vcmp.lt.s32.totalorder %v1034, 16
        %vm1038 = vcmp.lt.s32.totalorder %v1035, 16
        %vm1039 = vcmp.lt.s32.totalorder %v1036, 16
        %v1040 = vsel %vm1037, 1, 0
        %v1041 = vsel %vm1038, 1, 0
        %v1042 = vsel %vm1039, 1, 0
        %v1043 = vcvt.s32.f32 %v1040
        %v1044 = vcvt.s32.f32 %v1041
        %v1045 = vcvt.s32.f32 %v1042
        %v1046 = vld [vmem:[%s263] sm:$0xff]
        %v1047 = vld [vmem:[%s263 + $0x8] sm:$0xff]
        %v1048 = vld [vmem:[%s263 + $0x10] sm:$0xff]
        %v1049 = vld [vmem:[%s263 + $0x18] sm:$0xff]
        %v1050 = vld [vmem:[%s263 + $0x20] sm:$0xff]
        %v1051 = vld [vmem:[%s263 + $0x28] sm:$0xff]
        %v1052 = vld [vmem:[%s263 + $0x30] sm:$0xff]
        %v1053 = vld [vmem:[%s263 + $0x38] sm:$0xff]
        %v1054 = vld [vmem:[%s263 + $0x40] sm:$0xff]
        %v1055 = vld [vmem:[%s263 + $0x48] sm:$0xff]
        %v1056 = vld [vmem:[%s263 + $0x50] sm:$0xff]
        %v1057 = vld [vmem:[%s263 + $0x58] sm:$0xff]
        %v1058 = vld [vmem:[%s263 + $0x60] sm:$0xff]
        %v1059 = vld [vmem:[%s263 + $0x68] sm:$0xff]
        %v1060 = vld [vmem:[%s263 + $0x70] sm:$0xff]
        %v1061 = vld [vmem:[%s263 + $0x78] sm:$0xff]
        %v1062 = vld [vmem:[%s263 + $0x80] sm:$0xff]
        %v1063 = vld [vmem:[%s263 + $0x88] sm:$0xff]
        %v1064 = vld [vmem:[%s263 + $0x90] sm:$0xff]
        %v1065 = vld [vmem:[%s263 + $0x98] sm:$0xff]
        %v1066 = vld [vmem:[%s263 + $0xa0] sm:$0xff]
        %v1067 = vld [vmem:[%s263 + $0xa8] sm:$0xff]
        %v1068 = vld [vmem:[%s263 + $0xb0] sm:$0xff]
        %v1069 = vld [vmem:[%s263 + $0xb8] sm:$0xff]
        %v1070 = vmul.f32 %v1046, %v1043
        %v1071 = vmul.f32 %v1047, %v1044
        %v1072 = vmul.f32 %v1048, %v1045
        %v1073 = vmul.f32 %v1049, %v1043
        %v1074 = vmul.f32 %v1050, %v1044
        %v1075 = vmul.f32 %v1051, %v1045
        %v1076 = vmul.f32 %v1052, %v1043
        %v1077 = vmul.f32 %v1053, %v1044
        %v1078 = vmul.f32 %v1054, %v1045
        %v1079 = vmul.f32 %v1055, %v1043
        %v1080 = vmul.f32 %v1056, %v1044
        %v1081 = vmul.f32 %v1057, %v1045
        %v1082 = vmul.f32 %v1058, %v1043
        %v1083 = vmul.f32 %v1059, %v1044
        %v1084 = vmul.f32 %v1060, %v1045
        %v1085 = vmul.f32 %v1061, %v1043
        %v1086 = vmul.f32 %v1062, %v1044
        %v1087 = vmul.f32 %v1063, %v1045
        %v1088 = vmul.f32 %v1064, %v1043
        %v1089 = vmul.f32 %v1065, %v1044
        %v1090 = vmul.f32 %v1066, %v1045
        %v1091 = vmul.f32 %v1067, %v1043
        %v1092 = vmul.f32 %v1068, %v1044
        %v1093 = vmul.f32 %v1069, %v1045
        %v1094 = vadd.f32 %v1070, %v1071
        %v1095 = vsel %vm961, %v1072, 0.0
        %v1096 = vadd.f32 %v1094, %v1095
        %1097 = vadd.xlane.f32.xlu0 %v1096
        %v1098 = vpop.xlane.xlu0 %1097
        %v1099 = vadd.f32 %v1073, %v1074
        %v1100 = vsel %vm961, %v1075, 0.0
        %v1101 = vadd.f32 %v1099, %v1100
        %1102 = vadd.xlane.f32.xlu0 %v1101
        %v1103 = vpop.xlane.xlu0 %1102
        %v1104 = vadd.f32 %v1076, %v1077
        %v1105 = vsel %vm961, %v1078, 0.0
        %v1106 = vadd.f32 %v1104, %v1105
        %1107 = vadd.xlane.f32.xlu0 %v1106
        %v1108 = vpop.xlane.xlu0 %1107
        %v1109 = vadd.f32 %v1079, %v1080
        %v1110 = vsel %vm961, %v1081, 0.0
        %v1111 = vadd.f32 %v1109, %v1110
        %1112 = vadd.xlane.f32.xlu0 %v1111
        %v1113 = vpop.xlane.xlu0 %1112
        %v1114 = vadd.f32 %v1082, %v1083
        %v1115 = vsel %vm961, %v1084, 0.0
        %v1116 = vadd.f32 %v1114, %v1115
        %1117 = vadd.xlane.f32.xlu0 %v1116
        %v1118 = vpop.xlane.xlu0 %1117
        %v1119 = vadd.f32 %v1085, %v1086
        %v1120 = vsel %vm961, %v1087, 0.0
        %v1121 = vadd.f32 %v1119, %v1120
        %1122 = vadd.xlane.f32.xlu0 %v1121
        %v1123 = vpop.xlane.xlu0 %1122
        %v1124 = vadd.f32 %v1088, %v1089
        %v1125 = vsel %vm961, %v1090, 0.0
        %v1126 = vadd.f32 %v1124, %v1125
        %1127 = vadd.xlane.f32.xlu0 %v1126
        %v1128 = vpop.xlane.xlu0 %1127
        %v1129 = vadd.f32 %v1091, %v1092
        %v1130 = vsel %vm961, %v1093, 0.0
        %v1131 = vadd.f32 %v1129, %v1130
        %1132 = vadd.xlane.f32.xlu0 %v1131
        %v1133 = vpop.xlane.xlu0 %1132
        %v1134 = vadd.f32 %v1098, %v1103
        %v1135 = vadd.f32 %v1134, %v1108
        %v1136 = vadd.f32 %v1135, %v1113
        %v1137 = vadd.f32 %v1136, %v1118
        %v1138 = vadd.f32 %v1137, %v1123
        %v1139 = vadd.f32 %v1138, %v1128
        %v1140 = vadd.f32 %v1139, %v1133
        %v1141 = vmul.f32 %v1140, 0.00048828125
        %v1142 = vsub.f32 %v1046, %v1141
        %v1143 = vsub.f32 %v1047, %v1141
        %v1144 = vsub.f32 %v1048, %v1141
        %v1145 = vsub.f32 %v1049, %v1141
        %v1146 = vsub.f32 %v1050, %v1141
        %v1147 = vsub.f32 %v1051, %v1141
        %v1148 = vsub.f32 %v1052, %v1141
        %v1149 = vsub.f32 %v1053, %v1141
        %v1150 = vsub.f32 %v1054, %v1141
        %v1151 = vsub.f32 %v1055, %v1141
        %v1152 = vsub.f32 %v1056, %v1141
        %v1153 = vsub.f32 %v1057, %v1141
        %v1154 = vsub.f32 %v1058, %v1141
        %v1155 = vsub.f32 %v1059, %v1141
        %v1156 = vsub.f32 %v1060, %v1141
        %v1157 = vsub.f32 %v1061, %v1141
        %v1158 = vsub.f32 %v1062, %v1141
        %v1159 = vsub.f32 %v1063, %v1141
        %v1160 = vsub.f32 %v1064, %v1141
        %v1161 = vsub.f32 %v1065, %v1141
        %v1162 = vsub.f32 %v1066, %v1141
        %v1163 = vsub.f32 %v1067, %v1141
        %v1164 = vsub.f32 %v1068, %v1141
        %v1165 = vsub.f32 %v1069, %v1141
        %v1166 = vmul.f32 %v1142, %v1043
        %v1167 = vmul.f32 %v1143, %v1044
        %v1168 = vmul.f32 %v1144, %v1045
        %v1169 = vmul.f32 %v1145, %v1043
        %v1170 = vmul.f32 %v1146, %v1044
        %v1171 = vmul.f32 %v1147, %v1045
        %v1172 = vmul.f32 %v1148, %v1043
        %v1173 = vmul.f32 %v1149, %v1044
        %v1174 = vmul.f32 %v1150, %v1045
        %v1175 = vmul.f32 %v1151, %v1043
        %v1176 = vmul.f32 %v1152, %v1044
        %v1177 = vmul.f32 %v1153, %v1045
        %v1178 = vmul.f32 %v1154, %v1043
        %v1179 = vmul.f32 %v1155, %v1044
        %v1180 = vmul.f32 %v1156, %v1045
        %v1181 = vmul.f32 %v1157, %v1043
        %v1182 = vmul.f32 %v1158, %v1044
        %v1183 = vmul.f32 %v1159, %v1045
        %v1184 = vmul.f32 %v1160, %v1043
        %v1185 = vmul.f32 %v1161, %v1044
        %v1186 = vmul.f32 %v1162, %v1045
        %v1187 = vmul.f32 %v1163, %v1043
        %v1188 = vmul.f32 %v1164, %v1044
        %v1189 = vmul.f32 %v1165, %v1045
        %v1190 = vmul.f32 %v1166, %v1166
        %v1191 = vmul.f32 %v1167, %v1167
        %v1192 = vmul.f32 %v1168, %v1168
        %v1193 = vmul.f32 %v1169, %v1169
        %v1194 = vmul.f32 %v1170, %v1170
        %v1195 = vmul.f32 %v1171, %v1171
        %v1196 = vmul.f32 %v1172, %v1172
        %v1197 = vmul.f32 %v1173, %v1173
        %v1198 = vmul.f32 %v1174, %v1174
        %v1199 = vmul.f32 %v1175, %v1175
        %v1200 = vmul.f32 %v1176, %v1176
        %v1201 = vmul.f32 %v1177, %v1177
        %v1202 = vmul.f32 %v1178, %v1178
        %v1203 = vmul.f32 %v1179, %v1179
        %v1204 = vmul.f32 %v1180, %v1180
        %v1205 = vmul.f32 %v1181, %v1181
        %v1206 = vmul.f32 %v1182, %v1182
        %v1207 = vmul.f32 %v1183, %v1183
        %v1208 = vmul.f32 %v1184, %v1184
        %v1209 = vmul.f32 %v1185, %v1185
        %v1210 = vmul.f32 %v1186, %v1186
        %v1211 = vmul.f32 %v1187, %v1187
        %v1212 = vmul.f32 %v1188, %v1188
        %v1213 = vmul.f32 %v1189, %v1189
        %v1214 = vadd.f32 %v1190, %v1191
        %v1215 = vsel %vm961, %v1192, 0.0
        %v1216 = vadd.f32 %v1214, %v1215
        %1217 = vadd.xlane.f32.xlu0 %v1216
        %v1218 = vpop.xlane.xlu0 %1217
        %v1219 = vadd.f32 %v1193, %v1194
        %v1220 = vsel %vm961, %v1195, 0.0
        %v1221 = vadd.f32 %v1219, %v1220
        %1222 = vadd.xlane.f32.xlu0 %v1221
        %v1223 = vpop.xlane.xlu0 %1222
        %v1224 = vadd.f32 %v1196, %v1197
        %v1225 = vsel %vm961, %v1198, 0.0
        %v1226 = vadd.f32 %v1224, %v1225
        %1227 = vadd.xlane.f32.xlu0 %v1226
        %v1228 = vpop.xlane.xlu0 %1227
        %v1229 = vadd.f32 %v1199, %v1200
        %v1230 = vsel %vm961, %v1201, 0.0
        %v1231 = vadd.f32 %v1229, %v1230
        %1232 = vadd.xlane.f32.xlu0 %v1231
        %v1233 = vpop.xlane.xlu0 %1232
        %v1234 = vadd.f32 %v1202, %v1203
        %v1235 = vsel %vm961, %v1204, 0.0
        %v1236 = vadd.f32 %v1234, %v1235
        %1237 = vadd.xlane.f32.xlu0 %v1236
        %v1238 = vpop.xlane.xlu0 %1237
        %v1239 = vadd.f32 %v1205, %v1206
        %v1240 = vsel %vm961, %v1207, 0.0
        %v1241 = vadd.f32 %v1239, %v1240
        %1242 = vadd.xlane.f32.xlu0 %v1241
        %v1243 = vpop.xlane.xlu0 %1242
        %v1244 = vadd.f32 %v1208, %v1209
        %v1245 = vsel %vm961, %v1210, 0.0
        %v1246 = vadd.f32 %v1244, %v1245
        %1247 = vadd.xlane.f32.xlu0 %v1246
        %v1248 = vpop.xlane.xlu0 %1247
        %v1249 = vadd.f32 %v1211, %v1212
        %v1250 = vsel %vm961, %v1213, 0.0
        %v1251 = vadd.f32 %v1249, %v1250
        %1252 = vadd.xlane.f32.xlu0 %v1251
        %v1253 = vpop.xlane.xlu0 %1252
        %v1254 = vadd.f32 %v1218, %v1223
        %v1255 = vadd.f32 %v1254, %v1228
        %v1256 = vadd.f32 %v1255, %v1233
        %v1257 = vadd.f32 %v1256, %v1238
        %v1258 = vadd.f32 %v1257, %v1243
        %v1259 = vadd.f32 %v1258, %v1248
        %v1260 = vadd.f32 %v1259, %v1253
        %v1261 = vmul.f32 %v1260, 0.00048828125
        %v1262 = vld [vmem:[%s254] sm:$0xff]
        %v1263 = vld [vmem:[%s258] sm:$0xff]
        %v1264 = vadd.f32 %v1261, 1e-05
        %v1265 = vrsqrt.pop %v1264
        %v1266 = vmul.f32 %v1262, %v1265
        %v1267 = vmul.f32 %v1141, %v1266
        %v1268 = vsub.f32 %v1263, %v1267
        %1270 = vset.pattern.permute.xlu0 0
        %1271 = vperm.xlu0 %1270, %v1266
        %v1272 = vpop.permute.xlu0 %1271
        %v1274 = vmul.f32 %v1046, %v1272
        %v1275 = vmul.f32 %v1047, %v1272
        %v1276 = vmul.f32 %v1048, %v1272
        %v1277 = vmul.f32 %v1049, %v1272
        %v1278 = vmul.f32 %v1050, %v1272
        %v1279 = vmul.f32 %v1051, %v1272
        %v1280 = vmul.f32 %v1052, %v1272
        %v1281 = vmul.f32 %v1053, %v1272
        %v1282 = vmul.f32 %v1054, %v1272
        %v1283 = vmul.f32 %v1055, %v1272
        %v1284 = vmul.f32 %v1056, %v1272
        %v1285 = vmul.f32 %v1057, %v1272
        %v1286 = vmul.f32 %v1058, %v1272
        %v1287 = vmul.f32 %v1059, %v1272
        %v1288 = vmul.f32 %v1060, %v1272
        %v1289 = vmul.f32 %v1061, %v1272
        %v1290 = vmul.f32 %v1062, %v1272
        %v1291 = vmul.f32 %v1063, %v1272
        %v1292 = vmul.f32 %v1064, %v1272
        %v1293 = vmul.f32 %v1065, %v1272
        %v1294 = vmul.f32 %v1066, %v1272
        %v1295 = vmul.f32 %v1067, %v1272
        %v1296 = vmul.f32 %v1068, %v1272
        %v1297 = vmul.f32 %v1069, %v1272
        %1299 = vset.pattern.permute.xlu0 0
        %1300 = vperm.xlu0 %1299, %v1268
        %v1301 = vpop.permute.xlu0 %1300
        %v1303 = vadd.f32 %v1274, %v1301
        %v1304 = vadd.f32 %v1275, %v1301
        %v1305 = vadd.f32 %v1276, %v1301
        %v1306 = vadd.f32 %v1277, %v1301
        %v1307 = vadd.f32 %v1278, %v1301
        %v1308 = vadd.f32 %v1279, %v1301
        %v1309 = vadd.f32 %v1280, %v1301
        %v1310 = vadd.f32 %v1281, %v1301
        %v1311 = vadd.f32 %v1282, %v1301
        %v1312 = vadd.f32 %v1283, %v1301
        %v1313 = vadd.f32 %v1284, %v1301
        %v1314 = vadd.f32 %v1285, %v1301
        %v1315 = vadd.f32 %v1286, %v1301
        %v1316 = vadd.f32 %v1287, %v1301
        %v1317 = vadd.f32 %v1288, %v1301
        %v1318 = vadd.f32 %v1289, %v1301
        %v1319 = vadd.f32 %v1290, %v1301
        %v1320 = vadd.f32 %v1291, %v1301
        %v1321 = vadd.f32 %v1292, %v1301
        %v1322 = vadd.f32 %v1293, %v1301
        %v1323 = vadd.f32 %v1294, %v1301
        %v1324 = vadd.f32 %v1295, %v1301
        %v1325 = vadd.f32 %v1296, %v1301
        %v1326 = vadd.f32 %v1297, %v1301
        %v1327 = vmax.f32 %v1303, 0.0
        %v1328 = vmax.f32 %v1304, 0.0
        %v1329 = vmax.f32 %v1305, 0.0
        %v1330 = vmax.f32 %v1306, 0.0
        %v1331 = vmax.f32 %v1307, 0.0
        %v1332 = vmax.f32 %v1308, 0.0
        %v1333 = vmax.f32 %v1309, 0.0
        %v1334 = vmax.f32 %v1310, 0.0
        %v1335 = vmax.f32 %v1311, 0.0
        %v1336 = vmax.f32 %v1312, 0.0
        %v1337 = vmax.f32 %v1313, 0.0
        %v1338 = vmax.f32 %v1314, 0.0
        %v1339 = vmax.f32 %v1315, 0.0
        %v1340 = vmax.f32 %v1316, 0.0
        %v1341 = vmax.f32 %v1317, 0.0
        %v1342 = vmax.f32 %v1318, 0.0
        %v1343 = vmax.f32 %v1319, 0.0
        %v1344 = vmax.f32 %v1320, 0.0
        %v1345 = vmax.f32 %v1321, 0.0
        %v1346 = vmax.f32 %v1322, 0.0
        %v1347 = vmax.f32 %v1323, 0.0
        %v1348 = vmax.f32 %v1324, 0.0
        %v1349 = vmax.f32 %v1325, 0.0
        %v1350 = vmax.f32 %v1326, 0.0
        %1351 = vst [vmem:[%s263] sm:$0xff] %v1327
        %1352 = vst [vmem:[%s263 + $0x8] sm:$0xff] %v1328
        %1353 = vst.msk [vmem:[%s263 + $0x10] sm:$0xff] %vm961, %v1329
        %1354 = vst [vmem:[%s263 + $0x18] sm:$0xff] %v1330
        %1355 = vst [vmem:[%s263 + $0x20] sm:$0xff] %v1331
        %1356 = vst.msk [vmem:[%s263 + $0x28] sm:$0xff] %vm961, %v1332
        %1357 = vst [vmem:[%s263 + $0x30] sm:$0xff] %v1333
        %1358 = vst [vmem:[%s263 + $0x38] sm:$0xff] %v1334
        %1359 = vst.msk [vmem:[%s263 + $0x40] sm:$0xff] %vm961, %v1335
        %1360 = vst [vmem:[%s263 + $0x48] sm:$0xff] %v1336
        %1361 = vst [vmem:[%s263 + $0x50] sm:$0xff] %v1337
        %1362 = vst.msk [vmem:[%s263 + $0x58] sm:$0xff] %vm961, %v1338
        %1363 = vst [vmem:[%s263 + $0x60] sm:$0xff] %v1339
        %1364 = vst [vmem:[%s263 + $0x68] sm:$0xff] %v1340
        %1365 = vst.msk [vmem:[%s263 + $0x70] sm:$0xff] %vm961, %v1341
        %1366 = vst [vmem:[%s263 + $0x78] sm:$0xff] %v1342
        %1367 = vst [vmem:[%s263 + $0x80] sm:$0xff] %v1343
        %1368 = vst.msk [vmem:[%s263 + $0x88] sm:$0xff] %vm961, %v1344
        %1369 = vst [vmem:[%s263 + $0x90] sm:$0xff] %v1345
        %1370 = vst [vmem:[%s263 + $0x98] sm:$0xff] %v1346
        %1371 = vst.msk [vmem:[%s263 + $0xa0] sm:$0xff] %vm961, %v1347
        %1372 = vst [vmem:[%s263 + $0xa8] sm:$0xff] %v1348
        %1373 = vst [vmem:[%s263 + $0xb0] sm:$0xff] %v1349
        %1374 = vst.msk [vmem:[%s263 + $0xb8] sm:$0xff] %vm961, %v1350
      $region40: #{upconv_block.1} parent=35 // pred_fallthru
        _
      %p1375 = scmp.lt.s32.totalorder %s19, 0
      %s1376 = scalar_select %p1375, %s19, 0
      %s1377 = smul.addr %s1376, 3
      %s1378 = smul.addr %s1377, 8
      %s1379 = scalar_lea.vmem %s4, %s1378
      // Predicated region
      $region41: #{upconv_block.1} parent=35 // pred_check
        %p1380 = pneg %p149
      $region42: #{upconv_block.1} parent=35 // pred_check_branch
        %1382 = sbr.rel (%p1380) target = $region44
      $region43: #{upconv_block.1} parent=35 // pred_region
        _
      $region44: #{upconv_block.1} parent=35 // pred_fallthru
        _
      // Predicated region
      $region45: #{upconv_block.1} parent=35 // pred_check
        %p1383 = pneg %p149
      $region46: #{upconv_block.1} parent=35 // pred_check_branch
        %1385 = sbr.rel (%p1383) target = $region48
      $region47: #{upconv_block.1} parent=35 // pred_region
        %p1386 = scmp.lt.s32.totalorder %s19, 0
        %s1387 = scalar_select %p1386, %s19, 0
        %s1388 = smul.addr %s1387, 3
        %s1389 = smul.addr %s1388, 8
        %s1390 = scalar_lea.vmem %s4, %s1389
      $region48: #{upconv_block.1} parent=35 // pred_fallthru
        _
    $region36: #{upconv_block.1} parent=5 // pred_fallthru
      _
    %p1391 = scmp.le.s32.totalorder 2, %s10
    // Predicated region
    $region49: #{upconv_block.1} parent=5 // pred_check
      %p1392 = pneg %p1391
    $region50: #{upconv_block.1} parent=5 // pred_check_branch
      %1394 = sbr.rel (%p1392) target = $region52
    $region51: #{upconv_block.1} parent=5 // pred_region
      %s1395 = ssub.s32 %s10, 2
    $region52: #{upconv_block.1} parent=5 // pred_fallthru
      _
  $region6: #{upconv_block.1} parent=0 // loop_footer
    %s14 = sadd.s32 1, %s10
  $region7: #{upconv_block.1} parent=0 // loop_footer_branch
    %9 = sbr.rel target = $region3
  $region8: #{upconv_block.1} parent=0 // loop_exit
    _

</llo_original>
